<compile_context>
chip_gen: v7x
topology: tpu7x:2x2x1
jax: 0.10.0
libtpu: 0.0.40
codegen_flags: <defaults>
</compile_context>

<pallas_src>
import math
import functools

import jax
import jax.numpy as jnp
from jax.experimental import pallas as pl
from jax.experimental.pallas import tpu as pltpu


def cross_attention_kernel(q_ref, k_ref, v_ref, w_qkv_ref, b_qkv_ref,
                           w_o_ref, vec_ref, out_ref,
                           qh_sc, m_sc, l_sc, acc_sc, *,
                           nhead, compute_dtype):
    """Grid = (batch blocks, kv blocks); kv axis is the online-softmax reduction.

    q_ref:     (b_blk, L, E)        invariant across the kv axis
    k_ref/v_ref: (b_blk, s_blk, E)
    w_qkv_ref: (3, E, E)            Wq.T (pre-scaled) / Wk.T / Wv.T
    b_qkv_ref: (3, E)               bq (pre-scaled) / bk / bv  (f32)
    w_o_ref:   (E, E)               Wo.T
    vec_ref:   (3, E)               bo / gamma / beta           (f32)
    out_ref:   (b_blk, L, E)        written only on the last kv step
    qh_sc:     (H*b_blk, L, hd)     projected+head-split Q (compute dtype)
    m_sc/l_sc: (H*b_blk, L, 1)      running max / denominator   (f32)
    acc_sc:    (H*b_blk, L, hd)     running output accumulator  (f32)
    """
    cd = compute_dtype
    f32 = jnp.float32

    b_blk, L, E = q_ref.shape
    s_blk = k_ref.shape[1]
    hd = E // nhead
    BL = b_blk * L
    BS = b_blk * s_blk

    j = pl.program_id(1)

    def split_heads(x, rows):
        # (b_blk*rows, E) -> (H*b_blk, rows, hd): static lane slices, stacked on
        # a new leading (major) dim, then a row-major leading-dim split.
        xs = jnp.stack([x[:, h * hd:(h + 1) * hd] for h in range(nhead)], axis=0)
        return xs.reshape(nhead * b_blk, rows, hd)

    # ---- init (once per batch block): zero the online-softmax state and
    #      project+split Q a single time, stashed in scratch for all kv steps.
    @pl.when(j == 0)
    def _init():
        m_sc[...] = jnp.full(m_sc.shape, -jnp.inf, f32)
        l_sc[...] = jnp.zeros(l_sc.shape, f32)
        acc_sc[...] = jnp.zeros(acc_sc.shape, f32)
        q2 = q_ref[...].reshape(BL, E).astype(cd)
        qp = jnp.dot(q2, w_qkv_ref[0], preferred_element_type=f32) + b_qkv_ref[0]
        qh_sc[...] = split_heads(qp, L).astype(qh_sc.dtype)

    # ---- per-kv-block: full-width K/V projections, head split, online softmax.
    k2 = k_ref[...].reshape(BS, E).astype(cd)
    v2 = v_ref[...].reshape(BS, E).astype(cd)
    kp = jnp.dot(k2, w_qkv_ref[1], preferred_element_type=f32) + b_qkv_ref[1]
    vp = jnp.dot(v2, w_qkv_ref[2], preferred_element_type=f32) + b_qkv_ref[2]
    kh = split_heads(kp, s_blk).astype(cd)
    vh = split_heads(vp, s_blk).astype(cd)
    qh = qh_sc[...].astype(cd)

    s = jnp.einsum('nld,nsd->nls', qh, kh, preferred_element_type=f32)
    m_prev = m_sc[...]
    m_new = jnp.maximum(m_prev, jnp.max(s, axis=-1, keepdims=True))
    alpha = jnp.exp(m_prev - m_new)
    p = jnp.exp(s - m_new)          # f32 exp (v5e has no bf16 EUP)
    l_sc[...] = alpha * l_sc[...] + jnp.sum(p, axis=-1, keepdims=True)
    acc_sc[...] = alpha * acc_sc[...] + jnp.einsum(
        'nls,nsd->nld', p.astype(cd), vh, preferred_element_type=f32)
    m_sc[...] = m_new

    # ---- finalize (last kv step): normalize, merge heads into lanes, single
    #      full-depth output projection, residual + LayerNorm (all f32).
    @pl.when(j == pl.num_programs(1) - 1)
    def _finalize():
        o = acc_sc[...] * pl.reciprocal(l_sc[...], approx=True)   # (H*b, L, hd)
        o = o.reshape(nhead, BL, hd)                              # leading merge/split
        o2 = jnp.concatenate([o[h] for h in range(nhead)], axis=-1).astype(cd)
        attn = jnp.dot(o2, w_o_ref[...], preferred_element_type=f32) + vec_ref[0]
        x = q_ref[...].reshape(BL, E) + attn                      # residual, f32
        mean = jnp.mean(x, axis=-1, keepdims=True)
        xc = x - mean
        var = jnp.mean(xc * xc, axis=-1, keepdims=True)
        y = xc * jax.lax.rsqrt(var + 1e-5)
        out_ref[...] = ((y * vec_ref[1] + vec_ref[2])
                        .astype(out_ref.dtype).reshape(b_blk, L, E))


def cross_attention(q, k, v, params, nhead, *,
                    compute_dtype=jnp.bfloat16, b_blk=None, s_blk=None):
    """q: (L, N, E), k/v: (S, N, E) float32 -> (L, N, E) float32."""
    L, N, E = q.shape
    S = k.shape[0]
    assert E % nhead == 0
    hd = E // nhead
    scale = 1.0 / math.sqrt(hd)

    # KV tile: the (s_blk, E) block's sublane dim must be a multiple of 8 or the
    # full extent S.
    if s_blk is None:
        cands = [d for d in range(8, S + 1, 8) if S % d == 0 and d <= 512]
        s_blk = max(cands) if cands else S
    assert S % s_blk == 0 and (s_blk % 8 == 0 or s_blk == S)

    # Batch tile: budget-driven (inputs are double-buffered; weights, scratch
    # and in-kernel temporaries counted roughly), capped at N//2 so the parallel
    # grid axis has >= 2 steps and both TensorCores are used on v7x.
    cdb = jnp.dtype(compute_dtype).itemsize

    def est_bytes(bb):
        f32b = 4
        act = 2 * f32b * (2 * bb * L * E + 2 * 2 * bb * s_blk * E)     # q/out + k/v
        wts = 2 * (4 * E * E * cdb + 6 * E * f32b)
        scr = bb * L * E * (cdb + f32b) + 2 * nhead * bb * L * 128 * f32b
        tmp = 4 * f32b * bb * max(L, s_blk) * E + 2 * f32b * nhead * bb * L * s_blk
        return act + wts + scr + tmp

    if b_blk is None:
        cap = N if N == 1 else max(1, N // 2)
        budget = 24 * 2 ** 20
        fits = [d for d in range(1, cap + 1) if N % d == 0 and est_bytes(d) <= budget]
        b_blk = max(fits) if fits else 1
    assert N % b_blk == 0

    # Batch-major 3-D layout: each (b_blk, L/s_blk, E) block is one contiguous DMA.
    q3 = jnp.transpose(q, (1, 0, 2))      # (N, L, E)
    k3 = jnp.transpose(k, (1, 0, 2))      # (N, S, E)
    v3 = jnp.transpose(v, (1, 0, 2))

    wq, wk, wv, bq, bk, bv, wo, bo, gamma, beta = params
    # One-time parameter repack (cache this in a real model): pre-transpose,
    # fuse Wq/Wk/Wv into one buffer, fold the attention scale into Wq/bq.
    w_qkv = jnp.stack([wq.T * scale, wk.T, wv.T]).astype(compute_dtype)   # (3, E, E)
    b_qkv = jnp.stack([bq * scale, bk, bv]).astype(jnp.float32)           # (3, E)
    w_o = wo.T.astype(compute_dtype)                                      # (E, E)
    vec = jnp.stack([bo, gamma, beta]).astype(jnp.float32)                # (3, E)

    grid = (N // b_blk, S // s_blk)
    vmem_limit = int(min(48 * 2 ** 20, max(2 * est_bytes(b_blk), 32 * 2 ** 20)))

    out3 = pl.pallas_call(
        functools.partial(cross_attention_kernel, nhead=nhead,
                          compute_dtype=compute_dtype),
        out_shape=jax.ShapeDtypeStruct((N, L, E), jnp.float32),
        grid_spec=pltpu.PrefetchScalarGridSpec(
            num_scalar_prefetch=0,
            grid=grid,
            in_specs=[
                pl.BlockSpec((b_blk, L, E), lambda n, j: (n, 0, 0)),      # q
                pl.BlockSpec((b_blk, s_blk, E), lambda n, j: (n, j, 0)),  # k
                pl.BlockSpec((b_blk, s_blk, E), lambda n, j: (n, j, 0)),  # v
                pl.BlockSpec((3, E, E), lambda n, j: (0, 0, 0)),          # Wq/Wk/Wv
                pl.BlockSpec((3, E), lambda n, j: (0, 0)),                # bq/bk/bv
                pl.BlockSpec((E, E), lambda n, j: (0, 0)),                # Wo
                pl.BlockSpec((3, E), lambda n, j: (0, 0)),                # bo/gamma/beta
            ],
            out_specs=pl.BlockSpec((b_blk, L, E), lambda n, j: (n, 0, 0)),
            scratch_shapes=[
                pltpu.VMEM((nhead * b_blk, L, hd), compute_dtype),   # qh
                pltpu.VMEM((nhead * b_blk, L, 1), jnp.float32),      # running max
                pltpu.VMEM((nhead * b_blk, L, 1), jnp.float32),      # running denom
                pltpu.VMEM((nhead * b_blk, L, hd), jnp.float32),     # accumulator
            ]),
        compiler_params=pltpu.CompilerParams(
            dimension_semantics=("parallel", "arbitrary"),
            vmem_limit_bytes=vmem_limit),
    )(q3, k3, v3, w_qkv, b_qkv, w_o, vec)

    return jnp.transpose(out3, (1, 0, 2))   # back to (L, N, E)


def reference(q, k, v, params, nhead):
    """Pure-JAX f32 reference mirroring PyTorch semantics."""
    wq, wk, wv, bq, bk, bv, wo, bo, gamma, beta = params
    L, N, E = q.shape
    S = k.shape[0]
    hd = E // nhead
    scale = 1.0 / math.sqrt(hd)

    Q = jnp.einsum('lne,fe->lnf', q, wq) + bq
    K = jnp.einsum('sne,fe->snf', k, wk) + bk
    V = jnp.einsum('sne,fe->snf', v, wv) + bv
    Qh = Q.reshape(L, N, nhead, hd)
    Kh = K.reshape(S, N, nhead, hd)
    Vh = V.reshape(S, N, nhead, hd)
    scores = jnp.einsum('lnhd,snhd->nhls', Qh, Kh) * scale
    p = jax.nn.softmax(scores, axis=-1)
    attn = jnp.einsum('nhls,snhd->lnhd', p, Vh).reshape(L, N, E)
    proj = jnp.einsum('lne,fe->lnf', attn, wo) + bo
    x = q + proj
    mean = jnp.mean(x, axis=-1, keepdims=True)
    var = jnp.mean((x - mean) ** 2, axis=-1, keepdims=True)
    return (x - mean) / jnp.sqrt(var + 1e-5) * gamma + beta


def init_params(key, d_model):
    """Deterministic synthetic weights (shapes match nn.MultiheadAttention + LayerNorm)."""
    ks = jax.random.split(key, 10)
    bound = math.sqrt(6.0 / (2 * d_model))   # xavier-uniform-ish
    wq = jax.random.uniform(ks[0], (d_model, d_model), jnp.float32, -bound, bound)
    wk = jax.random.uniform(ks[1], (d_model, d_model), jnp.float32, -bound, bound)
    wv = jax.random.uniform(ks[2], (d_model, d_model), jnp.float32, -bound, bound)
    wo = jax.random.uniform(ks[3], (d_model, d_model), jnp.float32, -bound, bound)
    bq = jax.random.uniform(ks[4], (d_model,), jnp.float32, -0.1, 0.1)
    bk = jax.random.uniform(ks[5], (d_model,), jnp.float32, -0.1, 0.1)
    bv = jax.random.uniform(ks[6], (d_model,), jnp.float32, -0.1, 0.1)
    bo = jax.random.uniform(ks[7], (d_model,), jnp.float32, -0.1, 0.1)
    gamma = 1.0 + jax.random.uniform(ks[8], (d_model,), jnp.float32, -0.2, 0.2)
    beta = jax.random.uniform(ks[9], (d_model,), jnp.float32, -0.1, 0.1)
    return (wq, wk, wv, bq, bk, bv, wo, bo, gamma, beta)


if __name__ == "__main__":
    d_model, nhead = 32, 4
    L, S, N = 8, 16, 2

    key = jax.random.PRNGKey(0)
    kq, kk, kv, kp = jax.random.split(key, 4)
    q = jax.random.normal(kq, (L, N, d_model), jnp.float32)
    k = jax.random.normal(kk, (S, N, d_model), jnp.float32)
    v = jax.random.normal(kv, (S, N, d_model), jnp.float32)
    params = init_params(kp, d_model)

    ref = reference(q, k, v, params, nhead)

    # 1) f32 compute, default tiling (b_blk=1 -> 2 parallel batch steps,
    #    single kv step).  Tolerance covers the EUP approximate reciprocal.
    out_a = jax.block_until_ready(
        cross_attention(q, k, v, params, nhead, compute_dtype=jnp.float32))
    assert out_a.shape == (L, N, d_model)
    assert jnp.allclose(out_a, ref, atol=1e-2, rtol=1e-2), "f32 (default tiling) mismatch"

    # 2) f32 compute, multi-step online softmax (2 kv blocks) and multi-batch
    #    block (b_blk=2) — exercises the flash accumulator path.
    out_b = jax.block_until_ready(
        cross_attention(q, k, v, params, nhead, compute_dtype=jnp.float32,
                        b_blk=2, s_blk=8))
    assert jnp.allclose(out_b, ref, atol=1e-2, rtol=1e-2), "f32 (flash tiling) mismatch"

    # 3) bf16 compute (production config): bf16 MXU operands, f32 accumulation,
    #    f32 softmax/LayerNorm; checked loosely against the f32 reference.
    out_c = jax.block_until_ready(
        cross_attention(q, k, v, params, nhead, compute_dtype=jnp.bfloat16, s_blk=8))
    assert bool(jnp.all(jnp.isfinite(out_c)))
    assert jnp.allclose(out_c, ref, atol=2.5e-1, rtol=2.5e-1), "bf16 kernel mismatch"

    print("KERNEL_OK")
</pallas_src>

<mosaic_0001>
module attributes {stable_mosaic.version = 11 : i64} {
  func.func @cross_attention_kernel(%arg0: i32, %arg1: i32, %arg2: memref<1x8x32xf32, #tpu.memory_space<vmem>>, %arg3: memref<1x16x32xf32, #tpu.memory_space<vmem>>, %arg4: memref<1x16x32xf32, #tpu.memory_space<vmem>>, %arg5: memref<3x32x32xf32, #tpu.memory_space<vmem>>, %arg6: memref<3x32xf32, #tpu.memory_space<vmem>>, %arg7: memref<32x32xf32, #tpu.memory_space<vmem>>, %arg8: memref<3x32xf32, #tpu.memory_space<vmem>>, %arg9: memref<1x8x32xf32, #tpu.memory_space<vmem>>, %arg10: memref<4x8x8xf32, #tpu.memory_space<vmem>>, %arg11: memref<4x8x1xf32, #tpu.memory_space<vmem>>, %arg12: memref<4x8x1xf32, #tpu.memory_space<vmem>>, %arg13: memref<4x8x8xf32, #tpu.memory_space<vmem>>) attributes {dimension_semantics = [#tpu.dimension_semantics<parallel>, #tpu.dimension_semantics<arbitrary>], iteration_bounds = array<i64: 2, 1>, scalar_prefetch = 0 : i64, scratch_operands = 4 : i64, tpu.core_type = #tpu.core_type<tc>, window_params = [{transform_indices = @transform_0, window_bounds = array<i64: 1, 8, 32>}, {transform_indices = @transform_1, window_bounds = array<i64: 1, 16, 32>}, {transform_indices = @transform_2, window_bounds = array<i64: 1, 16, 32>}, {pipeline_mode = #tpu.pipeline_mode<synchronous>, transform_indices = @transform_3, window_bounds = array<i64: 3, 32, 32>}, {pipeline_mode = #tpu.pipeline_mode<synchronous>, transform_indices = @transform_4, window_bounds = array<i64: 3, 32>}, {pipeline_mode = #tpu.pipeline_mode<synchronous>, transform_indices = @transform_5, window_bounds = array<i64: 32, 32>}, {pipeline_mode = #tpu.pipeline_mode<synchronous>, transform_indices = @transform_6, window_bounds = array<i64: 3, 32>}, {transform_indices = @transform_7, window_bounds = array<i64: 1, 8, 32>}]} {
    %c0_i32 = arith.constant 0 : i32
    %0 = arith.cmpi eq, %arg1, %c0_i32 : i32
    %1 = arith.extui %0 : i1 to i32
    %c0_i32_0 = arith.constant 0 : i32
    %2 = arith.cmpi ne, %1, %c0_i32_0 : i32
    scf.if %2 {
      %cst_42 = arith.constant 0xFF800000 : f32
      %68 = vector.broadcast %cst_42 : f32 to vector<4x8x1xf32>
      %c0_43 = arith.constant 0 : index
      %c0_44 = arith.constant 0 : index
      %c0_45 = arith.constant 0 : index
      %69 = vector.load %arg11[%c0_43, %c0_44, %c0_45] : memref<4x8x1xf32, #tpu.memory_space<vmem>>, vector<4x8x1xf32>
      tpu.vector_store %arg11[%c0_43, %c0_44, %c0_45], %68 {strides = array<i32>} : memref<4x8x1xf32, #tpu.memory_space<vmem>>, vector<4x8x1xf32>,
      %cst_46 = arith.constant 0.000000e+00 : f32
      %70 = vector.broadcast %cst_46 : f32 to vector<4x8x1xf32>
      %c0_47 = arith.constant 0 : index
      %c0_48 = arith.constant 0 : index
      %c0_49 = arith.constant 0 : index
      %71 = vector.load %arg12[%c0_47, %c0_48, %c0_49] : memref<4x8x1xf32, #tpu.memory_space<vmem>>, vector<4x8x1xf32>
      tpu.vector_store %arg12[%c0_47, %c0_48, %c0_49], %70 {strides = array<i32>} : memref<4x8x1xf32, #tpu.memory_space<vmem>>, vector<4x8x1xf32>,
      %cst_50 = arith.constant 0.000000e+00 : f32
      %72 = vector.broadcast %cst_50 : f32 to vector<4x8x8xf32>
      %c0_51 = arith.constant 0 : index
      %c0_52 = arith.constant 0 : index
      %c0_53 = arith.constant 0 : index
      %73 = vector.load %arg13[%c0_51, %c0_52, %c0_53] : memref<4x8x8xf32, #tpu.memory_space<vmem>>, vector<4x8x8xf32>
      tpu.vector_store %arg13[%c0_51, %c0_52, %c0_53], %72 {strides = array<i32>} : memref<4x8x8xf32, #tpu.memory_space<vmem>>, vector<4x8x8xf32>,
      %c0_54 = arith.constant 0 : index
      %c0_55 = arith.constant 0 : index
      %c0_56 = arith.constant 0 : index
      %74 = vector.load %arg2[%c0_54, %c0_55, %c0_56] : memref<1x8x32xf32, #tpu.memory_space<vmem>>, vector<1x8x32xf32>
      %75 = vector.shape_cast %74 : vector<1x8x32xf32> to vector<8x32xf32>
      %c0_57 = arith.constant 0 : index
      %c0_58 = arith.constant 0 : index
      %c0_59 = arith.constant 0 : index
      %76 = vector.load %arg5[%c0_57, %c0_58, %c0_59] : memref<3x32x32xf32, #tpu.memory_space<vmem>>, vector<1x32x32xf32>
      %77 = vector.shape_cast %76 : vector<1x32x32xf32> to vector<32x32xf32>
      %cst_60 = arith.constant dense<0.000000e+00> : vector<8x32xf32>
      %78 = tpu.matmul %75, %77, %cst_60 {dimension_numbers = #tpu.dot_dimension_numbers<[1], [0], [0], [1], [0, 0, 1, 1], [], []>} : vector<8x32xf32>, vector<32x32xf32>, vector<8x32xf32> -> vector<8x32xf32>
      %c0_61 = arith.constant 0 : index
      %c0_62 = arith.constant 0 : index
      %79 = vector.load %arg6[%c0_61, %c0_62] : memref<3x32xf32, #tpu.memory_space<vmem>>, vector<1x32xf32>
      %80 = vector.shape_cast %79 : vector<1x32xf32> to vector<32xf32>
      %81 = vector.shape_cast %80 : vector<32xf32> to vector<1x32xf32>
      %82 = vector.broadcast %81 : vector<1x32xf32> to vector<8x32xf32>
      %83 = arith.addf %78, %82 : vector<8x32xf32>
      %84 = vector.extract_strided_slice %83 {offsets = [0, 0], sizes = [8, 8], strides = [1, 1]} : vector<8x32xf32> to vector<8x8xf32>
      %85 = vector.extract_strided_slice %83 {offsets = [0, 8], sizes = [8, 8], strides = [1, 1]} : vector<8x32xf32> to vector<8x8xf32>
      %86 = vector.extract_strided_slice %83 {offsets = [0, 16], sizes = [8, 8], strides = [1, 1]} : vector<8x32xf32> to vector<8x8xf32>
      %87 = vector.extract_strided_slice %83 {offsets = [0, 24], sizes = [8, 8], strides = [1, 1]} : vector<8x32xf32> to vector<8x8xf32>
      %88 = vector.shape_cast %84 : vector<8x8xf32> to vector<1x8x8xf32>
      %89 = vector.shape_cast %85 : vector<8x8xf32> to vector<1x8x8xf32>
      %90 = vector.shape_cast %86 : vector<8x8xf32> to vector<1x8x8xf32>
      %91 = vector.shape_cast %87 : vector<8x8xf32> to vector<1x8x8xf32>
      %92 = tpu.concatenate %88, %89, %90, %91 in 0 : vector<1x8x8xf32>, vector<1x8x8xf32>, vector<1x8x8xf32>, vector<1x8x8xf32> -> vector<4x8x8xf32>
      %c0_63 = arith.constant 0 : index
      %c0_64 = arith.constant 0 : index
      %c0_65 = arith.constant 0 : index
      %93 = vector.load %arg10[%c0_63, %c0_64, %c0_65] : memref<4x8x8xf32, #tpu.memory_space<vmem>>, vector<4x8x8xf32>
      tpu.vector_store %arg10[%c0_63, %c0_64, %c0_65], %92 {strides = array<i32>} : memref<4x8x8xf32, #tpu.memory_space<vmem>>, vector<4x8x8xf32>,
    } else {
    }
    %c0 = arith.constant 0 : index
    %c0_1 = arith.constant 0 : index
    %c0_2 = arith.constant 0 : index
    %3 = vector.load %arg3[%c0, %c0_1, %c0_2] : memref<1x16x32xf32, #tpu.memory_space<vmem>>, vector<1x16x32xf32>
    %4 = vector.shape_cast %3 : vector<1x16x32xf32> to vector<16x32xf32>
    %c0_3 = arith.constant 0 : index
    %c0_4 = arith.constant 0 : index
    %c0_5 = arith.constant 0 : index
    %5 = vector.load %arg4[%c0_3, %c0_4, %c0_5] : memref<1x16x32xf32, #tpu.memory_space<vmem>>, vector<1x16x32xf32>
    %6 = vector.shape_cast %5 : vector<1x16x32xf32> to vector<16x32xf32>
    %c1 = arith.constant 1 : index
    %c0_6 = arith.constant 0 : index
    %c0_7 = arith.constant 0 : index
    %7 = vector.load %arg5[%c1, %c0_6, %c0_7] : memref<3x32x32xf32, #tpu.memory_space<vmem>>, vector<1x32x32xf32>
    %8 = vector.shape_cast %7 : vector<1x32x32xf32> to vector<32x32xf32>
    %cst = arith.constant dense<0.000000e+00> : vector<16x32xf32>
    %9 = tpu.matmul %4, %8, %cst {dimension_numbers = #tpu.dot_dimension_numbers<[1], [0], [0], [1], [0, 0, 1, 1], [], []>} : vector<16x32xf32>, vector<32x32xf32>, vector<16x32xf32> -> vector<16x32xf32>
    %c1_8 = arith.constant 1 : index
    %c0_9 = arith.constant 0 : index
    %10 = vector.load %arg6[%c1_8, %c0_9] : memref<3x32xf32, #tpu.memory_space<vmem>>, vector<1x32xf32>
    %11 = vector.shape_cast %10 : vector<1x32xf32> to vector<32xf32>
    %12 = vector.shape_cast %11 : vector<32xf32> to vector<1x32xf32>
    %13 = vector.broadcast %12 : vector<1x32xf32> to vector<16x32xf32>
    %14 = arith.addf %9, %13 : vector<16x32xf32>
    %c2 = arith.constant 2 : index
    %c0_10 = arith.constant 0 : index
    %c0_11 = arith.constant 0 : index
    %15 = vector.load %arg5[%c2, %c0_10, %c0_11] : memref<3x32x32xf32, #tpu.memory_space<vmem>>, vector<1x32x32xf32>
    %16 = vector.shape_cast %15 : vector<1x32x32xf32> to vector<32x32xf32>
    %cst_12 = arith.constant dense<0.000000e+00> : vector<16x32xf32>
    %17 = tpu.matmul %6, %16, %cst_12 {dimension_numbers = #tpu.dot_dimension_numbers<[1], [0], [0], [1], [0, 0, 1, 1], [], []>} : vector<16x32xf32>, vector<32x32xf32>, vector<16x32xf32> -> vector<16x32xf32>
    %c2_13 = arith.constant 2 : index
    %c0_14 = arith.constant 0 : index
    %18 = vector.load %arg6[%c2_13, %c0_14] : memref<3x32xf32, #tpu.memory_space<vmem>>, vector<1x32xf32>
    %19 = vector.shape_cast %18 : vector<1x32xf32> to vector<32xf32>
    %20 = vector.shape_cast %19 : vector<32xf32> to vector<1x32xf32>
    %21 = vector.broadcast %20 : vector<1x32xf32> to vector<16x32xf32>
    %22 = arith.addf %17, %21 : vector<16x32xf32>
    %23 = vector.extract_strided_slice %14 {offsets = [0, 0], sizes = [16, 8], strides = [1, 1]} : vector<16x32xf32> to vector<16x8xf32>
    %24 = vector.extract_strided_slice %14 {offsets = [0, 8], sizes = [16, 8], strides = [1, 1]} : vector<16x32xf32> to vector<16x8xf32>
    %25 = vector.extract_strided_slice %14 {offsets = [0, 16], sizes = [16, 8], strides = [1, 1]} : vector<16x32xf32> to vector<16x8xf32>
    %26 = vector.extract_strided_slice %14 {offsets = [0, 24], sizes = [16, 8], strides = [1, 1]} : vector<16x32xf32> to vector<16x8xf32>
    %27 = vector.shape_cast %23 : vector<16x8xf32> to vector<1x16x8xf32>
    %28 = vector.shape_cast %24 : vector<16x8xf32> to vector<1x16x8xf32>
    %29 = vector.shape_cast %25 : vector<16x8xf32> to vector<1x16x8xf32>
    %30 = vector.shape_cast %26 : vector<16x8xf32> to vector<1x16x8xf32>
    %31 = tpu.concatenate %27, %28, %29, %30 in 0 : vector<1x16x8xf32>, vector<1x16x8xf32>, vector<1x16x8xf32>, vector<1x16x8xf32> -> vector<4x16x8xf32>
    %32 = vector.extract_strided_slice %22 {offsets = [0, 0], sizes = [16, 8], strides = [1, 1]} : vector<16x32xf32> to vector<16x8xf32>
    %33 = vector.extract_strided_slice %22 {offsets = [0, 8], sizes = [16, 8], strides = [1, 1]} : vector<16x32xf32> to vector<16x8xf32>
    %34 = vector.extract_strided_slice %22 {offsets = [0, 16], sizes = [16, 8], strides = [1, 1]} : vector<16x32xf32> to vector<16x8xf32>
    %35 = vector.extract_strided_slice %22 {offsets = [0, 24], sizes = [16, 8], strides = [1, 1]} : vector<16x32xf32> to vector<16x8xf32>
    %36 = vector.shape_cast %32 : vector<16x8xf32> to vector<1x16x8xf32>
    %37 = vector.shape_cast %33 : vector<16x8xf32> to vector<1x16x8xf32>
    %38 = vector.shape_cast %34 : vector<16x8xf32> to vector<1x16x8xf32>
    %39 = vector.shape_cast %35 : vector<16x8xf32> to vector<1x16x8xf32>
    %40 = tpu.concatenate %36, %37, %38, %39 in 0 : vector<1x16x8xf32>, vector<1x16x8xf32>, vector<1x16x8xf32>, vector<1x16x8xf32> -> vector<4x16x8xf32>
    %c0_15 = arith.constant 0 : index
    %c0_16 = arith.constant 0 : index
    %c0_17 = arith.constant 0 : index
    %41 = vector.load %arg10[%c0_15, %c0_16, %c0_17] : memref<4x8x8xf32, #tpu.memory_space<vmem>>, vector<4x8x8xf32>
    "tpu.trace_start"() <{level = 10 : i32, message = "nld,nsd->nls"}> : () -> ()
    %cst_18 = arith.constant dense<0.000000e+00> : vector<4x8x16xf32>
    %42 = tpu.matmul %41, %31, %cst_18 {dimension_numbers = #tpu.dot_dimension_numbers<[2], [2], [1], [1], [0, 0, 0, 1, 1, 1], [0], [0]>} : vector<4x8x8xf32>, vector<4x16x8xf32>, vector<4x8x16xf32> -> vector<4x8x16xf32>
    "tpu.trace_stop"() : () -> ()
    %c0_19 = arith.constant 0 : index
    %c0_20 = arith.constant 0 : index
    %c0_21 = arith.constant 0 : index
    %43 = vector.load %arg11[%c0_19, %c0_20, %c0_21] : memref<4x8x1xf32, #tpu.memory_space<vmem>>, vector<4x8x1xf32>
    %cst_22 = arith.constant dense<0xFF800000> : vector<4x8xf32>
    %44 = vector.multi_reduction <maximumf>, %42, %cst_22 [2] : vector<4x8x16xf32> to vector<4x8xf32>
    %45 = vector.shape_cast %44 : vector<4x8xf32> to vector<4x8x1xf32>
    %46 = arith.maximumf %43, %45 : vector<4x8x1xf32>
    %47 = arith.subf %43, %46 : vector<4x8x1xf32>
    %48 = math.exp %47 : vector<4x8x1xf32>
    %49 = vector.broadcast %46 : vector<4x8x1xf32> to vector<4x8x16xf32>
    %50 = arith.subf %42, %49 : vector<4x8x16xf32>
    %51 = math.exp %50 : vector<4x8x16xf32>
    %c0_23 = arith.constant 0 : index
    %c0_24 = arith.constant 0 : index
    %c0_25 = arith.constant 0 : index
    %52 = vector.load %arg12[%c0_23, %c0_24, %c0_25] : memref<4x8x1xf32, #tpu.memory_space<vmem>>, vector<4x8x1xf32>
    %53 = arith.mulf %48, %52 : vector<4x8x1xf32>
    %cst_26 = arith.constant dense<0.000000e+00> : vector<4x8xf32>
    %54 = vector.multi_reduction <add>, %51, %cst_26 [2] : vector<4x8x16xf32> to vector<4x8xf32>
    %55 = vector.shape_cast %54 : vector<4x8xf32> to vector<4x8x1xf32>
    %56 = arith.addf %53, %55 : vector<4x8x1xf32>
    %c0_27 = arith.constant 0 : index
    %c0_28 = arith.constant 0 : index
    %c0_29 = arith.constant 0 : index
    %57 = vector.load %arg12[%c0_27, %c0_28, %c0_29] : memref<4x8x1xf32, #tpu.memory_space<vmem>>, vector<4x8x1xf32>
    tpu.vector_store %arg12[%c0_27, %c0_28, %c0_29], %56 {strides = array<i32>} : memref<4x8x1xf32, #tpu.memory_space<vmem>>, vector<4x8x1xf32>,
    %c0_30 = arith.constant 0 : index
    %c0_31 = arith.constant 0 : index
    %c0_32 = arith.constant 0 : index
    %58 = vector.load %arg13[%c0_30, %c0_31, %c0_32] : memref<4x8x8xf32, #tpu.memory_space<vmem>>, vector<4x8x8xf32>
    %59 = vector.broadcast %48 : vector<4x8x1xf32> to vector<4x8x8xf32>
    %60 = arith.mulf %59, %58 : vector<4x8x8xf32>
    "tpu.trace_start"() <{level = 10 : i32, message = "nls,nsd->nld"}> : () -> ()
    %cst_33 = arith.constant dense<0.000000e+00> : vector<4x8x8xf32>
    %61 = tpu.matmul %51, %40, %cst_33 {dimension_numbers = #tpu.dot_dimension_numbers<[2], [1], [1], [2], [0, 0, 0, 1, 1, 2], [0], [0]>} : vector<4x8x16xf32>, vector<4x16x8xf32>, vector<4x8x8xf32> -> vector<4x8x8xf32>
    "tpu.trace_stop"() : () -> ()
    %62 = arith.addf %60, %61 : vector<4x8x8xf32>
    %c0_34 = arith.constant 0 : index
    %c0_35 = arith.constant 0 : index
    %c0_36 = arith.constant 0 : index
    %63 = vector.load %arg13[%c0_34, %c0_35, %c0_36] : memref<4x8x8xf32, #tpu.memory_space<vmem>>, vector<4x8x8xf32>
    tpu.vector_store %arg13[%c0_34, %c0_35, %c0_36], %62 {strides = array<i32>} : memref<4x8x8xf32, #tpu.memory_space<vmem>>, vector<4x8x8xf32>,
    %c0_37 = arith.constant 0 : index
    %c0_38 = arith.constant 0 : index
    %c0_39 = arith.constant 0 : index
    %64 = vector.load %arg11[%c0_37, %c0_38, %c0_39] : memref<4x8x1xf32, #tpu.memory_space<vmem>>, vector<4x8x1xf32>
    tpu.vector_store %arg11[%c0_37, %c0_38, %c0_39], %46 {strides = array<i32>} : memref<4x8x1xf32, #tpu.memory_space<vmem>>, vector<4x8x1xf32>,
    %c0_i32_40 = arith.constant 0 : i32
    %65 = arith.cmpi eq, %arg1, %c0_i32_40 : i32
    %66 = arith.extui %65 : i1 to i32
    %c0_i32_41 = arith.constant 0 : i32
    %67 = arith.cmpi ne, %66, %c0_i32_41 : i32
    scf.if %67 {
      %c0_42 = arith.constant 0 : index
      %c0_43 = arith.constant 0 : index
      %c0_44 = arith.constant 0 : index
      %68 = vector.load %arg13[%c0_42, %c0_43, %c0_44] : memref<4x8x8xf32, #tpu.memory_space<vmem>>, vector<4x8x8xf32>
      %c0_45 = arith.constant 0 : index
      %c0_46 = arith.constant 0 : index
      %c0_47 = arith.constant 0 : index
      %69 = vector.load %arg12[%c0_45, %c0_46, %c0_47] : memref<4x8x1xf32, #tpu.memory_space<vmem>>, vector<4x8x1xf32>
      %70 = tpu.reciprocal %69 {approx = true} : vector<4x8x1xf32> -> vector<4x8x1xf32>
      %71 = vector.broadcast %70 : vector<4x8x1xf32> to vector<4x8x8xf32>
      %72 = arith.mulf %68, %71 : vector<4x8x8xf32>
      %73 = vector.extract_strided_slice %72 {offsets = [0, 0, 0], sizes = [1, 8, 8], strides = [1, 1, 1]} : vector<4x8x8xf32> to vector<1x8x8xf32>
      %74 = vector.shape_cast %73 : vector<1x8x8xf32> to vector<8x8xf32>
      %75 = vector.extract_strided_slice %72 {offsets = [1, 0, 0], sizes = [1, 8, 8], strides = [1, 1, 1]} : vector<4x8x8xf32> to vector<1x8x8xf32>
      %76 = vector.shape_cast %75 : vector<1x8x8xf32> to vector<8x8xf32>
      %77 = vector.extract_strided_slice %72 {offsets = [2, 0, 0], sizes = [1, 8, 8], strides = [1, 1, 1]} : vector<4x8x8xf32> to vector<1x8x8xf32>
      %78 = vector.shape_cast %77 : vector<1x8x8xf32> to vector<8x8xf32>
      %79 = vector.extract_strided_slice %72 {offsets = [3, 0, 0], sizes = [1, 8, 8], strides = [1, 1, 1]} : vector<4x8x8xf32> to vector<1x8x8xf32>
      %80 = vector.shape_cast %79 : vector<1x8x8xf32> to vector<8x8xf32>
      %81 = tpu.concatenate %74, %76, %78, %80 in 1 : vector<8x8xf32>, vector<8x8xf32>, vector<8x8xf32>, vector<8x8xf32> -> vector<8x32xf32>
      %c0_48 = arith.constant 0 : index
      %c0_49 = arith.constant 0 : index
      %82 = vector.load %arg7[%c0_48, %c0_49] : memref<32x32xf32, #tpu.memory_space<vmem>>, vector<32x32xf32>
      %cst_50 = arith.constant dense<0.000000e+00> : vector<8x32xf32>
      %83 = tpu.matmul %81, %82, %cst_50 {dimension_numbers = #tpu.dot_dimension_numbers<[1], [0], [0], [1], [0, 0, 1, 1], [], []>} : vector<8x32xf32>, vector<32x32xf32>, vector<8x32xf32> -> vector<8x32xf32>
      %c0_51 = arith.constant 0 : index
      %c0_52 = arith.constant 0 : index
      %84 = vector.load %arg8[%c0_51, %c0_52] : memref<3x32xf32, #tpu.memory_space<vmem>>, vector<1x32xf32>
      %85 = vector.shape_cast %84 : vector<1x32xf32> to vector<32xf32>
      %86 = vector.shape_cast %85 : vector<32xf32> to vector<1x32xf32>
      %87 = vector.broadcast %86 : vector<1x32xf32> to vector<8x32xf32>
      %88 = arith.addf %83, %87 : vector<8x32xf32>
      %c0_53 = arith.constant 0 : index
      %c0_54 = arith.constant 0 : index
      %c0_55 = arith.constant 0 : index
      %89 = vector.load %arg2[%c0_53, %c0_54, %c0_55] : memref<1x8x32xf32, #tpu.memory_space<vmem>>, vector<1x8x32xf32>
      %90 = vector.shape_cast %89 : vector<1x8x32xf32> to vector<8x32xf32>
      %91 = arith.addf %90, %88 : vector<8x32xf32>
      %cst_56 = arith.constant dense<0.000000e+00> : vector<8xf32>
      %92 = vector.multi_reduction <add>, %91, %cst_56 [1] : vector<8x32xf32> to vector<8xf32>
      %93 = vector.shape_cast %92 : vector<8xf32> to vector<8x1xf32>
      %cst_57 = arith.constant 3.200000e+01 : f32
      %94 = vector.broadcast %cst_57 : f32 to vector<8x1xf32>
      %95 = arith.divf %93, %94 : vector<8x1xf32>
      %96 = vector.broadcast %95 : vector<8x1xf32> to vector<8x32xf32>
      %97 = arith.subf %91, %96 : vector<8x32xf32>
      %98 = arith.mulf %97, %97 : vector<8x32xf32>
      %cst_58 = arith.constant dense<0.000000e+00> : vector<8xf32>
      %99 = vector.multi_reduction <add>, %98, %cst_58 [1] : vector<8x32xf32> to vector<8xf32>
      %100 = vector.shape_cast %99 : vector<8xf32> to vector<8x1xf32>
      %cst_59 = arith.constant 3.200000e+01 : f32
      %101 = vector.broadcast %cst_59 : f32 to vector<8x1xf32>
      %102 = arith.divf %100, %101 : vector<8x1xf32>
      %cst_60 = arith.constant 9.99999974E-6 : f32
      %103 = vector.broadcast %cst_60 : f32 to vector<8x1xf32>
      %104 = arith.addf %102, %103 : vector<8x1xf32>
      %105 = math.rsqrt %104 : vector<8x1xf32>
      %106 = vector.broadcast %105 : vector<8x1xf32> to vector<8x32xf32>
      %107 = arith.mulf %97, %106 : vector<8x32xf32>
      %c1_61 = arith.constant 1 : index
      %c0_62 = arith.constant 0 : index
      %108 = vector.load %arg8[%c1_61, %c0_62] : memref<3x32xf32, #tpu.memory_space<vmem>>, vector<1x32xf32>
      %109 = vector.shape_cast %108 : vector<1x32xf32> to vector<32xf32>
      %110 = vector.shape_cast %109 : vector<32xf32> to vector<1x32xf32>
      %111 = vector.broadcast %110 : vector<1x32xf32> to vector<8x32xf32>
      %112 = arith.mulf %107, %111 : vector<8x32xf32>
      %c2_63 = arith.constant 2 : index
      %c0_64 = arith.constant 0 : index
      %113 = vector.load %arg8[%c2_63, %c0_64] : memref<3x32xf32, #tpu.memory_space<vmem>>, vector<1x32xf32>
      %114 = vector.shape_cast %113 : vector<1x32xf32> to vector<32xf32>
      %115 = vector.shape_cast %114 : vector<32xf32> to vector<1x32xf32>
      %116 = vector.broadcast %115 : vector<1x32xf32> to vector<8x32xf32>
      %117 = arith.addf %112, %116 : vector<8x32xf32>
      %118 = vector.shape_cast %117 : vector<8x32xf32> to vector<1x8x32xf32>
      %c0_65 = arith.constant 0 : index
      %c0_66 = arith.constant 0 : index
      %c0_67 = arith.constant 0 : index
      %119 = vector.load %arg9[%c0_65, %c0_66, %c0_67] : memref<1x8x32xf32, #tpu.memory_space<vmem>>, vector<1x8x32xf32>
      tpu.vector_store %arg9[%c0_65, %c0_66, %c0_67], %118 {strides = array<i32>} : memref<1x8x32xf32, #tpu.memory_space<vmem>>, vector<1x8x32xf32>,
    } else {
    }
    return
  }
  func.func @transform_0(%arg0: i32, %arg1: i32) -> (i32, i32, i32) {
    %c0_i32 = arith.constant 0 : i32
    %c0_i32_0 = arith.constant 0 : i32
    %c0_i32_1 = arith.constant 0 : i32
    return %arg0, %c0_i32, %c0_i32_0 : i32, i32, i32
  }
  func.func @transform_1(%arg0: i32, %arg1: i32) -> (i32, i32, i32) {
    %c0_i32 = arith.constant 0 : i32
    %c0_i32_0 = arith.constant 0 : i32
    return %arg0, %arg1, %c0_i32 : i32, i32, i32
  }
  func.func @transform_2(%arg0: i32, %arg1: i32) -> (i32, i32, i32) {
    %c0_i32 = arith.constant 0 : i32
    %c0_i32_0 = arith.constant 0 : i32
    return %arg0, %arg1, %c0_i32 : i32, i32, i32
  }
  func.func @transform_3(%arg0: i32, %arg1: i32) -> (i32, i32, i32) {
    %c0_i32 = arith.constant 0 : i32
    %c0_i32_0 = arith.constant 0 : i32
    %c0_i32_1 = arith.constant 0 : i32
    %c0_i32_2 = arith.constant 0 : i32
    return %c0_i32, %c0_i32_0, %c0_i32_1 : i32, i32, i32
  }
  func.func @transform_4(%arg0: i32, %arg1: i32) -> (i32, i32) {
    %c0_i32 = arith.constant 0 : i32
    %c0_i32_0 = arith.constant 0 : i32
    %c0_i32_1 = arith.constant 0 : i32
    return %c0_i32, %c0_i32_0 : i32, i32
  }
  func.func @transform_5(%arg0: i32, %arg1: i32) -> (i32, i32) {
    %c0_i32 = arith.constant 0 : i32
    %c0_i32_0 = arith.constant 0 : i32
    %c0_i32_1 = arith.constant 0 : i32
    return %c0_i32, %c0_i32_0 : i32, i32
  }
  func.func @transform_6(%arg0: i32, %arg1: i32) -> (i32, i32) {
    %c0_i32 = arith.constant 0 : i32
    %c0_i32_0 = arith.constant 0 : i32
    %c0_i32_1 = arith.constant 0 : i32
    return %c0_i32, %c0_i32_0 : i32, i32
  }
  func.func @transform_7(%arg0: i32, %arg1: i32) -> (i32, i32, i32) {
    %c0_i32 = arith.constant 0 : i32
    %c0_i32_0 = arith.constant 0 : i32
    %c0_i32_1 = arith.constant 0 : i32
    return %arg0, %c0_i32, %c0_i32_0 : i32, i32, i32
  }
}

</mosaic_0001>

<llo_original>
// kernel: tpu_custom_call.1
$region0: #{tpu_custom_call.1}
  #allocation0 [shape = 'u32[]', space=smem, size = 0x4, offset = 0x4, fixed_abs, tag = 'smem constant byte address 0x4 - core index']
  #allocation1 [shape = 'u32[144,128]{1,0:T(1,128)}', space=vmem, size = 0x12000, scoped, tag = 'internal scratch']
  #allocation2 [shape = 'f32[4,8,8]{2,1,0:T(8,128)}', space=vmem, size = 0x4000, scoped, tag = 'scratch operand']
  #allocation3 [shape = 'f32[4,8,1]{2,1,0:T(8,128)}', space=vmem, size = 0x4000, scoped, tag = 'scratch operand']
  #allocation4 [shape = 'f32[4,8,1]{2,1,0:T(8,128)}', space=vmem, size = 0x4000, scoped, tag = 'scratch operand']
  #allocation5 [shape = 'f32[4,8,8]{2,1,0:T(8,128)}', space=vmem, size = 0x4000, scoped, tag = 'scratch operand']
  %s0 = inlined_call_operand.hbm [shape: f32[2,8,32], index: 0, kind: input, shape index: {}]
  %s1 = inlined_call_operand.hbm [shape: f32[2,16,32], index: 1, kind: input, shape index: {}]
  %s2 = inlined_call_operand.hbm [shape: f32[2,16,32], index: 2, kind: input, shape index: {}]
  %s3 = inlined_call_operand.hbm [shape: f32[3,32,32], index: 3, kind: input, shape index: {}]
  %s4 = inlined_call_operand.vmem [shape: f32[3,32], index: 4, kind: input, shape index: {}]
  %s5 = inlined_call_operand.hbm [shape: f32[32,32], index: 5, kind: input, shape index: {}]
  %s6 = inlined_call_operand.vmem [shape: f32[3,32], index: 6, kind: input, shape index: {}]
  %s7 = inlined_call_operand.hbm [shape: f32[2,8,32], index: 7, kind: output, shape index: {}]
  %s8 = sld [smem:[#allocation0]]
  $region89: #{tpu_custom_call.1} parent=0
    _
  %s10 = ssub.s32 1, %s8
  %s11 = scalar_select 0, %s10, %s8
  $region1: #{tpu_custom_call.1} parent=0
    #allocation6 [shape = 'u8[8192]{0}', space=vmem, size = 0x2000, scoped, tag = 'input window, operand 0']
    #allocation7 [shape = 's32[2]{0}', space=sflag, size = 0x8, scoped, tag = 'scoped memory for tpu_custom_call.1']
    #allocation8 [shape = 's32[2]{0}', space=sflag, size = 0x8, scoped, tag = 'scoped memory for tpu_custom_call.1']
    #allocation9 [shape = 'u8[16384]{0}', space=vmem, size = 0x4000, scoped, tag = 'input window, operand 1']
    #allocation10 [shape = 's32[2]{0}', space=sflag, size = 0x8, scoped, tag = 'scoped memory for tpu_custom_call.1']
    #allocation11 [shape = 'u8[16384]{0}', space=vmem, size = 0x4000, scoped, tag = 'input window, operand 2']
    #allocation12 [shape = 'u8[49152]{0}', space=vmem, size = 0xc000, scoped, tag = 'input window, operand 3, single buffered']
    #allocation13 [shape = 's32[1]{0}', space=sflag, size = 0x4, scoped, tag = 'scoped memory for tpu_custom_call.1']
    #allocation14 [shape = 'u8[16384]{0}', space=vmem, size = 0x4000, scoped, tag = 'input window, operand 5, single buffered']
    #allocation15 [shape = 'u8[8192]{0}', space=vmem, size = 0x2000, scoped, tag = 'output window, operand 0']
    %12 = vsyncpa [#allocation7], 0
    %s13 = scalar_lea.sflag [#allocation7], 1
    %14 = vsyncpa %s13, 0
    %15 = vsyncpa [#allocation10], 0
    %s16 = scalar_lea.sflag [#allocation10], 1
    %17 = vsyncpa %s16, 0
    %18 = vsyncpa [#allocation13], 0
    %19 = vsyncpa [#allocation8], 0
    %s20 = scalar_lea.sflag [#allocation8], 1
    %21 = vsyncpa %s20, 0
    loop: start=0, step=1, limit=4
    $region2: #{tpu_custom_call.1} parent=1 // loop_pre_header
      _
    $region3: #{tpu_custom_call.1} parent=1 // loop_header
      %s23 = sphi 0, %s27
      %p24 = scmp.ge.s32.totalorder %s23, 4
      %s30 = sphi 0, %s42
      %s31 = sphi 0, %s38
      %s32 = sphi 0, %s30
      %s33 = sphi 0, %s31
      %s34 = sphi 0, %s32
      %s35 = sphi 0, %s33
      %s45 = sphi 0, %s47
      %s48 = sphi 0, %s45
      %s49 = sphi 0, %s48
      %s65 = sphi 0, %s49
      %s73 = sphi 0, %s75
      %s76 = sphi 0, %s73
      %s77 = sphi 0, %s76
      %s93 = sphi 0, %s77
      %s101 = sphi 0, %s103
      %s104 = sphi 0, %s101
      %s105 = sphi 0, %s104
      %s121 = sphi 0, %s105
      %s125 = sphi 0, %s125
      %s127 = sphi 0, %s125
      %s128 = sphi 0, %s127
      %s142 = sphi 0, %s128
      %s146 = sphi 0, %s146
      %s148 = sphi 0, %s146
      %s149 = sphi 0, %s148
      %s163 = sphi 0, %s149
      %s167 = sphi 0, %s167
      %s169 = sphi 0, %s167
      %s170 = sphi 0, %s169
      %s184 = sphi 0, %s170
      %s188 = sphi 0, %s188
      %s190 = sphi 0, %s188
      %s191 = sphi 0, %s190
      %s205 = sphi 0, %s191
      %s211 = sphi 0, %s213
      %s214 = sphi 0, %s211
      %s215 = sphi 0, %s214
      %s231 = sphi 0, %s215
    $region4: #{tpu_custom_call.1} parent=1 // loop_header_branch
      %26 = sbr.rel (%p24) target = $region8
    $region5: #{tpu_custom_call.1} parent=1 // loop_body
      %s28 = ssub.s32 %s23, 1
      %s29 = ssub.s32 %s23, 2
      %s36 = sadd.s32 1, %s31
      %p37 = scmp.ge.s32.totalorder %s36, 1
      %s38 = scalar_select %p37, 0, %s36
      %s39 = sadd.s32 1, %s30
      %s40 = scalar_select %p37, %s39, %s30
      %p41 = scmp.ge.s32.totalorder %s40, 2
      %s42 = scalar_select %p41, 0, %s40
      %s43 = ssub.s32 %s30, %s42
      %p44 = scmp.eq.s32.totalorder %s43, 0
      %s46 = sadd.s32 %s45, 1
      %s47 = scalar_select %p44, %s45, %s46
      %p50 = pneg %p44
      %p51 = scmp.eq.s32.totalorder %s23, 1
      %p52 = por %p50, %p51
      %p53 = scmp.ne.s32.totalorder %s45, %s48
      %p54 = scmp.eq.s32.totalorder %s23, 0
      %p55 = por %p53, %p54
      %p56 = scmp.ne.s32.totalorder %s45, %s48
      %p57 = scmp.eq.s32.totalorder %s28, 1
      %p58 = por %p56, %p57
      %p59 = scmp.ne.s32.totalorder %s48, %s49
      %p60 = scmp.eq.s32.totalorder %s28, 0
      %p61 = por %p59, %p60
      %p62 = scmp.ne.s32.totalorder %s48, %s49
      %p63 = scmp.eq.s32.totalorder %s29, 1
      %p64 = por %p62, %p63
      %p66 = scmp.ne.s32.totalorder %s49, %s65
      %p67 = scmp.eq.s32.totalorder %s29, 0
      %p68 = por %p66, %p67
      %s69 = ssub.s32 %s30, %s42
      %s70 = ssub.s32 %s31, %s38
      %s71 = sor.u32 %s69, %s70
      %p72 = scmp.eq.s32.totalorder %s71, 0
      %s74 = sadd.s32 %s73, 1
      %s75 = scalar_select %p72, %s73, %s74
      %p78 = pneg %p72
      %p79 = scmp.eq.s32.totalorder %s23, 1
      %p80 = por %p78, %p79
      %p81 = scmp.ne.s32.totalorder %s73, %s76
      %p82 = scmp.eq.s32.totalorder %s23, 0
      %p83 = por %p81, %p82
      %p84 = scmp.ne.s32.totalorder %s73, %s76
      %p85 = scmp.eq.s32.totalorder %s28, 1
      %p86 = por %p84, %p85
      %p87 = scmp.ne.s32.totalorder %s76, %s77
      %p88 = scmp.eq.s32.totalorder %s28, 0
      %p89 = por %p87, %p88
      %p90 = scmp.ne.s32.totalorder %s76, %s77
      %p91 = scmp.eq.s32.totalorder %s29, 1
      %p92 = por %p90, %p91
      %p94 = scmp.ne.s32.totalorder %s77, %s93
      %p95 = scmp.eq.s32.totalorder %s29, 0
      %p96 = por %p94, %p95
      %s97 = ssub.s32 %s30, %s42
      %s98 = ssub.s32 %s31, %s38
      %s99 = sor.u32 %s97, %s98
      %p100 = scmp.eq.s32.totalorder %s99, 0
      %s102 = sadd.s32 %s101, 1
      %s103 = scalar_select %p100, %s101, %s102
      %p106 = pneg %p100
      %p107 = scmp.eq.s32.totalorder %s23, 1
      %p108 = por %p106, %p107
      %p109 = scmp.ne.s32.totalorder %s101, %s104
      %p110 = scmp.eq.s32.totalorder %s23, 0
      %p111 = por %p109, %p110
      %p112 = scmp.ne.s32.totalorder %s101, %s104
      %p113 = scmp.eq.s32.totalorder %s28, 1
      %p114 = por %p112, %p113
      %p115 = scmp.ne.s32.totalorder %s104, %s105
      %p116 = scmp.eq.s32.totalorder %s28, 0
      %p117 = por %p115, %p116
      %p118 = scmp.ne.s32.totalorder %s104, %s105
      %p119 = scmp.eq.s32.totalorder %s29, 1
      %p120 = por %p118, %p119
      %p122 = scmp.ne.s32.totalorder %s105, %s121
      %p123 = scmp.eq.s32.totalorder %s29, 0
      %p124 = por %p122, %p123
      %s126 = sadd.s32 %s125, 1
      %p129 = scmp.eq.s32.totalorder %s23, 1
      %p130 = scmp.ne.s32.totalorder %s125, %s127
      %p131 = scmp.eq.s32.totalorder %s23, 0
      %p132 = por %p130, %p131
      %p133 = scmp.ne.s32.totalorder %s125, %s127
      %p134 = scmp.eq.s32.totalorder %s28, 1
      %p135 = por %p133, %p134
      %p136 = scmp.ne.s32.totalorder %s127, %s128
      %p137 = scmp.eq.s32.totalorder %s28, 0
      %p138 = por %p136, %p137
      %p139 = scmp.ne.s32.totalorder %s127, %s128
      %p140 = scmp.eq.s32.totalorder %s29, 1
      %p141 = por %p139, %p140
      %p143 = scmp.ne.s32.totalorder %s128, %s142
      %p144 = scmp.eq.s32.totalorder %s29, 0
      %p145 = por %p143, %p144
      %s147 = sadd.s32 %s146, 1
      %p150 = scmp.eq.s32.totalorder %s23, 1
      %p151 = scmp.ne.s32.totalorder %s146, %s148
      %p152 = scmp.eq.s32.totalorder %s23, 0
      %p153 = por %p151, %p152
      %p154 = scmp.ne.s32.totalorder %s146, %s148
      %p155 = scmp.eq.s32.totalorder %s28, 1
      %p156 = por %p154, %p155
      %p157 = scmp.ne.s32.totalorder %s148, %s149
      %p158 = scmp.eq.s32.totalorder %s28, 0
      %p159 = por %p157, %p158
      %p160 = scmp.ne.s32.totalorder %s148, %s149
      %p161 = scmp.eq.s32.totalorder %s29, 1
      %p162 = por %p160, %p161
      %p164 = scmp.ne.s32.totalorder %s149, %s163
      %p165 = scmp.eq.s32.totalorder %s29, 0
      %p166 = por %p164, %p165
      %s168 = sadd.s32 %s167, 1
      %p171 = scmp.eq.s32.totalorder %s23, 1
      %p172 = scmp.ne.s32.totalorder %s167, %s169
      %p173 = scmp.eq.s32.totalorder %s23, 0
      %p174 = por %p172, %p173
      %p175 = scmp.ne.s32.totalorder %s167, %s169
      %p176 = scmp.eq.s32.totalorder %s28, 1
      %p177 = por %p175, %p176
      %p178 = scmp.ne.s32.totalorder %s169, %s170
      %p179 = scmp.eq.s32.totalorder %s28, 0
      %p180 = por %p178, %p179
      %p181 = scmp.ne.s32.totalorder %s169, %s170
      %p182 = scmp.eq.s32.totalorder %s29, 1
      %p183 = por %p181, %p182
      %p185 = scmp.ne.s32.totalorder %s170, %s184
      %p186 = scmp.eq.s32.totalorder %s29, 0
      %p187 = por %p185, %p186
      %s189 = sadd.s32 %s188, 1
      %p192 = scmp.eq.s32.totalorder %s23, 1
      %p193 = scmp.ne.s32.totalorder %s188, %s190
      %p194 = scmp.eq.s32.totalorder %s23, 0
      %p195 = por %p193, %p194
      %p196 = scmp.ne.s32.totalorder %s188, %s190
      %p197 = scmp.eq.s32.totalorder %s28, 1
      %p198 = por %p196, %p197
      %p199 = scmp.ne.s32.totalorder %s190, %s191
      %p200 = scmp.eq.s32.totalorder %s28, 0
      %p201 = por %p199, %p200
      %p202 = scmp.ne.s32.totalorder %s190, %s191
      %p203 = scmp.eq.s32.totalorder %s29, 1
      %p204 = por %p202, %p203
      %p206 = scmp.ne.s32.totalorder %s191, %s205
      %p207 = scmp.eq.s32.totalorder %s29, 0
      %p208 = por %p206, %p207
      %s209 = ssub.s32 %s30, %s42
      %p210 = scmp.eq.s32.totalorder %s209, 0
      %s212 = sadd.s32 %s211, 1
      %s213 = scalar_select %p210, %s211, %s212
      %p216 = pneg %p210
      %p217 = scmp.eq.s32.totalorder %s23, 1
      %p218 = por %p216, %p217
      %p219 = scmp.ne.s32.totalorder %s211, %s214
      %p220 = scmp.eq.s32.totalorder %s23, 0
      %p221 = por %p219, %p220
      %p222 = scmp.ne.s32.totalorder %s211, %s214
      %p223 = scmp.eq.s32.totalorder %s28, 1
      %p224 = por %p222, %p223
      %p225 = scmp.ne.s32.totalorder %s214, %s215
      %p226 = scmp.eq.s32.totalorder %s28, 0
      %p227 = por %p225, %p226
      %p228 = scmp.ne.s32.totalorder %s214, %s215
      %p229 = scmp.eq.s32.totalorder %s29, 1
      %p230 = por %p228, %p229
      %p232 = scmp.ne.s32.totalorder %s215, %s231
      %p233 = scmp.eq.s32.totalorder %s29, 0
      %p234 = por %p232, %p233
      %p235 = scmp.le.s32.totalorder 1, %s23
      %p236 = scmp.lt.s32.totalorder %s23, 3
      %p237 = pnand %p235, %p236
      %p238 = pneg %p237
      // Predicated region
      $region9: #{tpu_custom_call.1} parent=5 // pred_check
        _
      $region10: #{tpu_custom_call.1} parent=5 // pred_check_branch
        %240 = sbr.rel (%p237) target = $region12
      $region11: #{tpu_custom_call.1} parent=5 // pred_region
        %s241 = ssub.s32 %s23, 1
        // Predicated region
        $region13: #{tpu_custom_call.1} parent=11 // pred_check
          %p242 = pneg %p138
        $region14: #{tpu_custom_call.1} parent=11 // pred_check_branch
          %244 = sbr.rel (%p242) target = $region16
        $region15: #{tpu_custom_call.1} parent=11 // pred_region
          %s246 = ssub.s32 1536, 1536
          %247 = vsyncadd [#allocation13], %s246
          %s248 = sshll.u32 [#allocation12], 4
          %s249 = int_to_ptr.vmem [resolvable:$true] %s248
          %254 = dma.hbm_to_vmem [thread:$0]  %s3, 1536, %s249, [#allocation13], 128, 128, 8
        $region16: #{tpu_custom_call.1} parent=11 // pred_fallthru
          _
        // Predicated region
        $region17: #{tpu_custom_call.1} parent=11 // pred_check
          %p255 = pneg %p159
        $region18: #{tpu_custom_call.1} parent=11 // pred_check_branch
          %257 = sbr.rel (%p255) target = $region20
        $region19: #{tpu_custom_call.1} parent=11 // pred_region
          _
        $region20: #{tpu_custom_call.1} parent=11 // pred_fallthru
          _
        // Predicated region
        $region21: #{tpu_custom_call.1} parent=11 // pred_check
          %p258 = pneg %p180
        $region22: #{tpu_custom_call.1} parent=11 // pred_check_branch
          %260 = sbr.rel (%p258) target = $region24
        $region23: #{tpu_custom_call.1} parent=11 // pred_region
          %s262 = ssub.s32 512, 512
          %263 = vsyncadd [#allocation13], %s262
          %s264 = sshll.u32 [#allocation14], 4
          %s265 = int_to_ptr.vmem [resolvable:$true] %s264
          %270 = dma.hbm_to_vmem [thread:$0]  %s5, 512, %s265, [#allocation13], 128, 128, 8
        $region24: #{tpu_custom_call.1} parent=11 // pred_fallthru
          _
        // Predicated region
        $region25: #{tpu_custom_call.1} parent=11 // pred_check
          %p271 = pneg %p201
        $region26: #{tpu_custom_call.1} parent=11 // pred_check_branch
          %273 = sbr.rel (%p271) target = $region28
        $region27: #{tpu_custom_call.1} parent=11 // pred_region
          _
        $region28: #{tpu_custom_call.1} parent=11 // pred_fallthru
          _
      $region12: #{tpu_custom_call.1} parent=5 // pred_fallthru
        _
      %p274 = scmp.lt.s32.totalorder %s23, 2
      // Predicated region
      $region29: #{tpu_custom_call.1} parent=5 // pred_check
        %p275 = pneg %p274
      $region30: #{tpu_custom_call.1} parent=5 // pred_check_branch
        %277 = sbr.rel (%p275) target = $region32
      $region31: #{tpu_custom_call.1} parent=5 // pred_region
        // Predicated region
        $region33: #{tpu_custom_call.1} parent=31 // pred_check
          %p278 = pneg %p55
        $region34: #{tpu_custom_call.1} parent=31 // pred_check_branch
          %280 = sbr.rel (%p278) target = $region36
        $region35: #{tpu_custom_call.1} parent=31 // pred_region
          %s281 = sand.u32 %s45, 1
          %s282 = scalar_lea.sflag [#allocation7], %s281
          %s283 = sand.u32 %s45, 1
          %s284 = smul.addr %s283, 8
          %s285 = scalar_lea.vmem [#allocation6], %s284
          %s287 = ssub.s32 128, 128
          %288 = vsyncadd %s282, %s287
          %s289 = smul.addr %s30, 128
          %s290 = scalar_lea.hbm %s0, %s289
          %s292 = sshll.u32 %s285, 4
          %s293 = int_to_ptr.vmem [resolvable:$true] %s292
          %295 = dma.hbm_to_vmem [thread:$0]  %s290, 128, %s293, %s282
        $region36: #{tpu_custom_call.1} parent=31 // pred_fallthru
          _
        // Predicated region
        $region37: #{tpu_custom_call.1} parent=31 // pred_check
          %p296 = pneg %p83
        $region38: #{tpu_custom_call.1} parent=31 // pred_check_branch
          %298 = sbr.rel (%p296) target = $region40
        $region39: #{tpu_custom_call.1} parent=31 // pred_region
          %s299 = sand.u32 %s23, 1
          %s300 = scalar_lea.sflag [#allocation10], %s299
          %s301 = sand.u32 %s73, 1
          %s302 = smul.addr %s301, 16
          %s303 = scalar_lea.vmem [#allocation9], %s302
          %s304 = smul.u32 2, %s31
          %s306 = ssub.s32 256, 256
          %307 = vsyncadd %s300, %s306
          %s308 = smul.addr %s30, 2
          %s309 = sadd.s32 %s304, %s308
          %s310 = smul.addr %s309, 128
          %s311 = scalar_lea.hbm %s1, %s310
          %s312 = sshll.u32 %s303, 4
          %s313 = int_to_ptr.vmem [resolvable:$true] %s312
          %318 = dma.hbm_to_vmem [thread:$0]  %s311, 256, %s313, %s300, 128, 128, 8
        $region40: #{tpu_custom_call.1} parent=31 // pred_fallthru
          _
        // Predicated region
        $region41: #{tpu_custom_call.1} parent=31 // pred_check
          %p319 = pneg %p111
        $region42: #{tpu_custom_call.1} parent=31 // pred_check_branch
          %321 = sbr.rel (%p319) target = $region44
        $region43: #{tpu_custom_call.1} parent=31 // pred_region
          %s322 = sand.u32 %s23, 1
          %s323 = scalar_lea.sflag [#allocation10], %s322
          %s324 = sand.u32 %s101, 1
          %s325 = smul.addr %s324, 16
          %s326 = scalar_lea.vmem [#allocation11], %s325
          %s327 = smul.u32 2, %s31
          %s329 = ssub.s32 256, 256
          %330 = vsyncadd %s323, %s329
          %s331 = smul.addr %s30, 2
          %s332 = sadd.s32 %s327, %s331
          %s333 = smul.addr %s332, 128
          %s334 = scalar_lea.hbm %s2, %s333
          %s335 = sshll.u32 %s326, 4
          %s336 = int_to_ptr.vmem [resolvable:$true] %s335
          %341 = dma.hbm_to_vmem [thread:$0]  %s334, 256, %s336, %s323, 128, 128, 8
        $region44: #{tpu_custom_call.1} parent=31 // pred_fallthru
          _
      $region32: #{tpu_custom_call.1} parent=5 // pred_fallthru
        _
      %p342 = scmp.le.s32.totalorder 1, %s23
      %p343 = scmp.lt.s32.totalorder %s23, 3
      %p344 = pnand %p342, %p343
      %p345 = pneg %p344
      // Predicated region
      $region45: #{tpu_custom_call.1} parent=5 // pred_check
        _
      $region46: #{tpu_custom_call.1} parent=5 // pred_check_branch
        %347 = sbr.rel (%p344) target = $region48
      $region47: #{tpu_custom_call.1} parent=5 // pred_region
        %s348 = ssub.s32 %s23, 1
        %s349 = sand.u32 %s48, 1
        %s350 = scalar_lea.sflag [#allocation7], %s349
        %s351 = sand.u32 %s48, 1
        %s352 = smul.addr %s351, 8
        %s353 = scalar_lea.vmem [#allocation6], %s352
        // Predicated region
        $region49: #{tpu_custom_call.1} parent=47 // pred_check
          %p354 = pneg %p61
        $region50: #{tpu_custom_call.1} parent=47 // pred_check_branch
          %356 = sbr.rel (%p354) target = $region52
        $region51: #{tpu_custom_call.1} parent=47 // pred_region
          %357 = dma.done %s350, 128
        $region52: #{tpu_custom_call.1} parent=47 // pred_fallthru
          _
        %s358 = sand.u32 %s28, 1
        %s359 = scalar_lea.sflag [#allocation10], %s358
        %s360 = sand.u32 %s76, 1
        %s361 = smul.addr %s360, 16
        %s362 = scalar_lea.vmem [#allocation9], %s361
        // Predicated region
        $region53: #{tpu_custom_call.1} parent=47 // pred_check
          %p363 = pneg %p89
        $region54: #{tpu_custom_call.1} parent=47 // pred_check_branch
          %365 = sbr.rel (%p363) target = $region56
        $region55: #{tpu_custom_call.1} parent=47 // pred_region
          %366 = dma.done %s359, 256
        $region56: #{tpu_custom_call.1} parent=47 // pred_fallthru
          _
        %s367 = sand.u32 %s28, 1
        %s368 = scalar_lea.sflag [#allocation10], %s367
        %s369 = sand.u32 %s104, 1
        %s370 = smul.addr %s369, 16
        %s371 = scalar_lea.vmem [#allocation11], %s370
        // Predicated region
        $region57: #{tpu_custom_call.1} parent=47 // pred_check
          %p372 = pneg %p117
        $region58: #{tpu_custom_call.1} parent=47 // pred_check_branch
          %374 = sbr.rel (%p372) target = $region60
        $region59: #{tpu_custom_call.1} parent=47 // pred_region
          %375 = dma.done %s368, 256
        $region60: #{tpu_custom_call.1} parent=47 // pred_fallthru
          _
        // Predicated region
        $region61: #{tpu_custom_call.1} parent=47 // pred_check
          %p376 = pneg %p138
        $region62: #{tpu_custom_call.1} parent=47 // pred_check_branch
          %378 = sbr.rel (%p376) target = $region64
        $region63: #{tpu_custom_call.1} parent=47 // pred_region
          %379 = dma.done [#allocation13], 1536
        $region64: #{tpu_custom_call.1} parent=47 // pred_fallthru
          _
        // Predicated region
        $region65: #{tpu_custom_call.1} parent=47 // pred_check
          %p380 = pneg %p180
        $region66: #{tpu_custom_call.1} parent=47 // pred_check_branch
          %382 = sbr.rel (%p380) target = $region68
        $region67: #{tpu_custom_call.1} parent=47 // pred_region
          %383 = dma.done [#allocation13], 512
        $region68: #{tpu_custom_call.1} parent=47 // pred_fallthru
          _
        %s384 = sand.u32 %s48, 1
        %s385 = scalar_lea.sflag [#allocation7], %s384
        %s386 = sand.u32 %s48, 1
        %s387 = smul.addr %s386, 8
        %s388 = scalar_lea.vmem [#allocation6], %s387
        %p389 = pneg %p61
        %p390 = pneg %p58
        %s391 = sand.u32 %s28, 1
        %s392 = scalar_lea.sflag [#allocation10], %s391
        %s393 = sand.u32 %s76, 1
        %s394 = smul.addr %s393, 16
        %s395 = scalar_lea.vmem [#allocation9], %s394
        %p396 = pneg %p89
        %p397 = pneg %p86
        %s398 = sand.u32 %s28, 1
        %s399 = scalar_lea.sflag [#allocation10], %s398
        %s400 = sand.u32 %s104, 1
        %s401 = smul.addr %s400, 16
        %s402 = scalar_lea.vmem [#allocation11], %s401
        %p403 = pneg %p117
        %p404 = pneg %p114
        %p405 = pneg %p138
        %p406 = pneg %p135
        %p407 = pneg %p159
        %p408 = pneg %p156
        %p409 = pneg %p180
        %p410 = pneg %p177
        %p411 = pneg %p201
        %p412 = pneg %p198
        %p413 = pneg %p227
        %p414 = pneg %p224
        %s415 = sand.u32 %s214, 1
        %s416 = scalar_lea.sflag [#allocation8], %s415
        %s417 = sand.u32 %s214, 1
        %s418 = smul.addr %s417, 8
        %s419 = scalar_lea.vmem [#allocation15], %s418
        %s420 = smul.u32 2, %s33
        %s421 = smul.u32 2, %s33
        %p422 = scmp.eq.s32.totalorder %s33, 0
        // Predicated region
        $region69: #{tpu_custom_call.1} parent=47 // pred_check
          %p423 = pneg %p422
        $region70: #{tpu_custom_call.1} parent=47 // pred_check_branch
          %425 = sbr.rel (%p423) target = $region72
        $region71: #{tpu_custom_call.1} parent=47 // pred_region
          %vm426 = vcmask 7168
          %427 = vst.msk [vmem:[#allocation3] sm:$0xff] %vm426, -inf
          %428 = vst.msk [vmem:[#allocation3 + $0x8] sm:$0xff] %vm426, -inf
          %429 = vst.msk [vmem:[#allocation3 + $0x10] sm:$0xff] %vm426, -inf
          %430 = vst.msk [vmem:[#allocation3 + $0x18] sm:$0xff] %vm426, -inf
          %431 = vst.msk [vmem:[#allocation4] sm:$0xff] %vm426, 0.0
          %432 = vst.msk [vmem:[#allocation4 + $0x8] sm:$0xff] %vm426, 0.0
          %433 = vst.msk [vmem:[#allocation4 + $0x10] sm:$0xff] %vm426, 0.0
          %434 = vst.msk [vmem:[#allocation4 + $0x18] sm:$0xff] %vm426, 0.0
          %vm435 = vcmask 64512
          %436 = vst.msk [vmem:[#allocation5] sm:$0xff] %vm435, 0.0
          %437 = vst.msk [vmem:[#allocation5 + $0x8] sm:$0xff] %vm435, 0.0
          %438 = vst.msk [vmem:[#allocation5 + $0x10] sm:$0xff] %vm435, 0.0
          %439 = vst.msk [vmem:[#allocation5 + $0x18] sm:$0xff] %vm435, 0.0
          %v440 = vld [vmem:[%s353] sm:$0xff]
          %v441 = vld [vmem:[#allocation12] sm:$0xff]
          %v442 = vld [vmem:[#allocation12 + $0x8] sm:$0xff]
          %v443 = vld [vmem:[#allocation12 + $0x10] sm:$0xff]
          %v444 = vld [vmem:[#allocation12 + $0x18] sm:$0xff]
          %v445 = vld [vmem:[%s4] sm:$0x1]
          %v446 = vlaneseq
          %v447 = vshrl.u32 %v446, 7
          %v448 = vsub.s32 0, %v447
          %v449 = vrot.slane %v445, %v448
          %vm450 = vcmask 261120
          %v452 = vsel %vm450, %v440, 0
          %454 = vmatprep.subr.mxu0 0.0
          %455 = vmatpush1.msra.mxu0 %v441
          %456 = vmatprep.subr.mxu0 0.0
          %457 = vmatpush1.msra.mxu0 %v442
          %458 = vmatprep.subr.mxu0 0.0
          %459 = vmatpush1.msra.mxu0 %v443
          %460 = vmatprep.subr.mxu0 0.0
          %461 = vmatpush1.msra.mxu0 %v444
          %462 = vmatprep.subr.mxu0 0.0
          %463 = vmatpush1.msra.mxu0 0.0
          %464 = vmatprep.subr.mxu0 0.0
          %465 = vmatpush1.msra.mxu0 0.0
          %466 = vmatprep.subr.mxu0 0.0
          %467 = vmatpush1.msra.mxu0 0.0
          %468 = vmatprep.subr.mxu0 0.0
          %469 = vmatpush1.msra.mxu0 0.0
          %470 = vmatprep.subr.mxu0 0.0
          %471 = vmatpush1.msra.mxu0 0.0
          %472 = vmatprep.subr.mxu0 0.0
          %473 = vmatpush1.msra.mxu0 0.0
          %474 = vmatprep.subr.mxu0 0.0
          %475 = vmatpush1.msra.mxu0 0.0
          %476 = vmatprep.subr.mxu0 0.0
          %477 = vmatpush1.msra.mxu0 0.0
          %478 = vmatprep.subr.mxu0 0.0
          %479 = vmatpush1.msra.mxu0 0.0
          %480 = vmatprep.subr.mxu0 0.0
          %481 = vmatpush1.msra.mxu0 0.0
          %482 = vmatprep.subr.mxu0 0.0
          %483 = vmatpush1.msra.mxu0 0.0
          %484 = vmatprep.subr.mxu0 0.0
          %485 = vmatpush1.msra.mxu0 0.0
          %486 = vmatprep.subr.mxu0 0.0
          %487 = vmatpush1.msra.mxu0 0.0
          %488 = vmatprep.subr.mxu0 0.0
          %489 = vmatpush1.msra.mxu0 0.0
          %490 = vmatprep.subr.mxu0 0.0
          %491 = vmatpush1.msra.mxu0 0.0
          %492 = vmatprep.subr.mxu0 0.0
          %493 = vmatpush1.msra.mxu0 0.0
          %494 = vmatprep.subr.mxu0 0.0
          %495 = vmatpush1.msra.mxu0 0.0
          %496 = vmatprep.subr.mxu0 0.0
          %497 = vmatpush1.msra.mxu0 0.0
          %498 = vmatprep.subr.mxu0 0.0
          %499 = vmatpush1.msra.mxu0 0.0
          %500 = vmatprep.subr.mxu0 0.0
          %501 = vmatpush1.msra.mxu0 0.0
          %502 = vmatprep.subr.mxu0 0.0
          %503 = vmatpush1.msra.mxu0 0.0
          %504 = vmatprep.subr.mxu0 0.0
          %505 = vmatpush1.msra.mxu0 0.0
          %506 = vmatprep.subr.mxu0 0.0
          %507 = vmatpush1.msra.mxu0 0.0
          %508 = vmatprep.subr.mxu0 0.0
          %509 = vmatpush1.msra.mxu0 0.0
          %510 = vmatprep.subr.mxu0 0.0
          %511 = vmatpush1.msra.mxu0 0.0
          %512 = vmatprep.subr.mxu0 0.0
          %513 = vmatpush1.msra.mxu0 0.0
          %514 = vmatprep.subr.mxu0 0.0
          %515 = vmatpush1.msra.mxu0 0.0
          %516 = vmatprep.subr.mxu0 0.0
          %517 = vmatpush1.msra.mxu0 0.0
          %518 = vmatprep.mubr.f32.mxu0 0.0
          %519 = vmatmul.mubr.f32.gmra.mrb[0].mxu0 %v452
          %v520 = vpop.f32.mrb[0].mxu0
          %v521 = vadd.f32 %v449, %v520
          %v522 = vpop.f32.mrb[0].mxu0
          %523 = vdwg.mxu0
          %525 = vrot.lane.b32.xlu0 %v521, 120
          %v526 = vpop.permute.xlu0 %525
          %528 = vrot.lane.b32.xlu0 %v521, 112
          %v529 = vpop.permute.xlu0 %528
          %531 = vrot.lane.b32.xlu0 %v521, 104
          %v532 = vpop.permute.xlu0 %531
          %534 = vst.msk [vmem:[#allocation2] sm:$0xff] %vm435, %v521
          %535 = vst.msk [vmem:[#allocation2 + $0x8] sm:$0xff] %vm435, %v526
          %536 = vst.msk [vmem:[#allocation2 + $0x10] sm:$0xff] %vm435, %v529
          %537 = vst.msk [vmem:[#allocation2 + $0x18] sm:$0xff] %vm435, %v532
        $region72: #{tpu_custom_call.1} parent=47 // pred_fallthru
          _
        %v538 = vld [vmem:[%s362] sm:$0xff]
        %v539 = vld [vmem:[%s362 + $0x8] sm:$0xff]
        %v540 = vld [vmem:[%s371] sm:$0xff]
        %v541 = vld [vmem:[%s371 + $0x8] sm:$0xff]
        %s542 = scalar_lea.vmem [#allocation12], 32
        %v543 = vld [vmem:[%s542] sm:$0xff]
        %v544 = vld [vmem:[%s542 + $0x8] sm:$0xff]
        %v545 = vld [vmem:[%s542 + $0x10] sm:$0xff]
        %v546 = vld [vmem:[%s542 + $0x18] sm:$0xff]
        %v547 = vld [vmem:[%s4 + $0x1] sm:$0x1]
        %v548 = vlaneseq
        %v549 = vshrl.u32 %v548, 7
        %v550 = vsub.s32 0, %v549
        %v551 = vrot.slane %v547, %v550
        %vm552 = vcmask 261120
        %v554 = vsel %vm552, %v538, 0
        %v557 = vsel %vm552, %v539, 0
        %559 = vmatprep.subr.mxu0 0.0
        %560 = vmatpush1.msra.mxu0 %v543
        %561 = vmatprep.subr.mxu0 0.0
        %562 = vmatpush1.msra.mxu0 %v544
        %563 = vmatprep.subr.mxu0 0.0
        %564 = vmatpush1.msra.mxu0 %v545
        %565 = vmatprep.subr.mxu0 0.0
        %566 = vmatpush1.msra.mxu0 %v546
        %567 = vmatprep.subr.mxu0 0.0
        %568 = vmatpush1.msra.mxu0 0.0
        %569 = vmatprep.subr.mxu0 0.0
        %570 = vmatpush1.msra.mxu0 0.0
        %571 = vmatprep.subr.mxu0 0.0
        %572 = vmatpush1.msra.mxu0 0.0
        %573 = vmatprep.subr.mxu0 0.0
        %574 = vmatpush1.msra.mxu0 0.0
        %575 = vmatprep.subr.mxu0 0.0
        %576 = vmatpush1.msra.mxu0 0.0
        %577 = vmatprep.subr.mxu0 0.0
        %578 = vmatpush1.msra.mxu0 0.0
        %579 = vmatprep.subr.mxu0 0.0
        %580 = vmatpush1.msra.mxu0 0.0
        %581 = vmatprep.subr.mxu0 0.0
        %582 = vmatpush1.msra.mxu0 0.0
        %583 = vmatprep.subr.mxu0 0.0
        %584 = vmatpush1.msra.mxu0 0.0
        %585 = vmatprep.subr.mxu0 0.0
        %586 = vmatpush1.msra.mxu0 0.0
        %587 = vmatprep.subr.mxu0 0.0
        %588 = vmatpush1.msra.mxu0 0.0
        %589 = vmatprep.subr.mxu0 0.0
        %590 = vmatpush1.msra.mxu0 0.0
        %591 = vmatprep.subr.mxu0 0.0
        %592 = vmatpush1.msra.mxu0 0.0
        %593 = vmatprep.subr.mxu0 0.0
        %594 = vmatpush1.msra.mxu0 0.0
        %595 = vmatprep.subr.mxu0 0.0
        %596 = vmatpush1.msra.mxu0 0.0
        %597 = vmatprep.subr.mxu0 0.0
        %598 = vmatpush1.msra.mxu0 0.0
        %599 = vmatprep.subr.mxu0 0.0
        %600 = vmatpush1.msra.mxu0 0.0
        %601 = vmatprep.subr.mxu0 0.0
        %602 = vmatpush1.msra.mxu0 0.0
        %603 = vmatprep.subr.mxu0 0.0
        %604 = vmatpush1.msra.mxu0 0.0
        %605 = vmatprep.subr.mxu0 0.0
        %606 = vmatpush1.msra.mxu0 0.0
        %607 = vmatprep.subr.mxu0 0.0
        %608 = vmatpush1.msra.mxu0 0.0
        %609 = vmatprep.subr.mxu0 0.0
        %610 = vmatpush1.msra.mxu0 0.0
        %611 = vmatprep.subr.mxu0 0.0
        %612 = vmatpush1.msra.mxu0 0.0
        %613 = vmatprep.subr.mxu0 0.0
        %614 = vmatpush1.msra.mxu0 0.0
        %615 = vmatprep.subr.mxu0 0.0
        %616 = vmatpush1.msra.mxu0 0.0
        %617 = vmatprep.subr.mxu0 0.0
        %618 = vmatpush1.msra.mxu0 0.0
        %619 = vmatprep.subr.mxu0 0.0
        %620 = vmatpush1.msra.mxu0 0.0
        %621 = vmatprep.subr.mxu0 0.0
        %622 = vmatpush1.msra.mxu0 0.0
        %623 = vmatprep.mubr.f32.mxu0 0.0
        %624 = vmatmul.mubr.f32.gmra.mrb[0].mxu0 %v554
        %v625 = vpop.f32.mrb[0].mxu0
        %v626 = vadd.f32 %v551, %v625
        %v627 = vpop.f32.mrb[0].mxu0
        %628 = vmatprep.mubr.f32.mxu0 0.0
        %629 = vmatmul.mubr.f32.gmra.mrb[0].mxu0 %v557
        %v630 = vpop.f32.mrb[0].mxu0
        %v631 = vadd.f32 %v551, %v630
        %v632 = vpop.f32.mrb[0].mxu0
        %633 = vdwg.mxu0
        %s634 = scalar_lea.vmem [#allocation12], 64
        %v635 = vld [vmem:[%s634] sm:$0xff]
        %v636 = vld [vmem:[%s634 + $0x8] sm:$0xff]
        %v637 = vld [vmem:[%s634 + $0x10] sm:$0xff]
        %v638 = vld [vmem:[%s634 + $0x18] sm:$0xff]
        %v639 = vld [vmem:[%s4 + $0x2] sm:$0x1]
        %v640 = vlaneseq
        %v641 = vshrl.u32 %v640, 7
        %v642 = vsub.s32 0, %v641
        %v643 = vrot.slane %v639, %v642
        %v645 = vsel %vm552, %v540, 0
        %v648 = vsel %vm552, %v541, 0
        %650 = vmatprep.subr.mxu0 0.0
        %651 = vmatpush1.msra.mxu0 %v635
        %652 = vmatprep.subr.mxu0 0.0
        %653 = vmatpush1.msra.mxu0 %v636
        %654 = vmatprep.subr.mxu0 0.0
        %655 = vmatpush1.msra.mxu0 %v637
        %656 = vmatprep.subr.mxu0 0.0
        %657 = vmatpush1.msra.mxu0 %v638
        %658 = vmatprep.subr.mxu0 0.0
        %659 = vmatpush1.msra.mxu0 0.0
        %660 = vmatprep.subr.mxu0 0.0
        %661 = vmatpush1.msra.mxu0 0.0
        %662 = vmatprep.subr.mxu0 0.0
        %663 = vmatpush1.msra.mxu0 0.0
        %664 = vmatprep.subr.mxu0 0.0
        %665 = vmatpush1.msra.mxu0 0.0
        %666 = vmatprep.subr.mxu0 0.0
        %667 = vmatpush1.msra.mxu0 0.0
        %668 = vmatprep.subr.mxu0 0.0
        %669 = vmatpush1.msra.mxu0 0.0
        %670 = vmatprep.subr.mxu0 0.0
        %671 = vmatpush1.msra.mxu0 0.0
        %672 = vmatprep.subr.mxu0 0.0
        %673 = vmatpush1.msra.mxu0 0.0
        %674 = vmatprep.subr.mxu0 0.0
        %675 = vmatpush1.msra.mxu0 0.0
        %676 = vmatprep.subr.mxu0 0.0
        %677 = vmatpush1.msra.mxu0 0.0
        %678 = vmatprep.subr.mxu0 0.0
        %679 = vmatpush1.msra.mxu0 0.0
        %680 = vmatprep.subr.mxu0 0.0
        %681 = vmatpush1.msra.mxu0 0.0
        %682 = vmatprep.subr.mxu0 0.0
        %683 = vmatpush1.msra.mxu0 0.0
        %684 = vmatprep.subr.mxu0 0.0
        %685 = vmatpush1.msra.mxu0 0.0
        %686 = vmatprep.subr.mxu0 0.0
        %687 = vmatpush1.msra.mxu0 0.0
        %688 = vmatprep.subr.mxu0 0.0
        %689 = vmatpush1.msra.mxu0 0.0
        %690 = vmatprep.subr.mxu0 0.0
        %691 = vmatpush1.msra.mxu0 0.0
        %692 = vmatprep.subr.mxu0 0.0
        %693 = vmatpush1.msra.mxu0 0.0
        %694 = vmatprep.subr.mxu0 0.0
        %695 = vmatpush1.msra.mxu0 0.0
        %696 = vmatprep.subr.mxu0 0.0
        %697 = vmatpush1.msra.mxu0 0.0
        %698 = vmatprep.subr.mxu0 0.0
        %699 = vmatpush1.msra.mxu0 0.0
        %700 = vmatprep.subr.mxu0 0.0
        %701 = vmatpush1.msra.mxu0 0.0
        %702 = vmatprep.subr.mxu0 0.0
        %703 = vmatpush1.msra.mxu0 0.0
        %704 = vmatprep.subr.mxu0 0.0
        %705 = vmatpush1.msra.mxu0 0.0
        %706 = vmatprep.subr.mxu0 0.0
        %707 = vmatpush1.msra.mxu0 0.0
        %708 = vmatprep.subr.mxu0 0.0
        %709 = vmatpush1.msra.mxu0 0.0
        %710 = vmatprep.subr.mxu0 0.0
        %711 = vmatpush1.msra.mxu0 0.0
        %712 = vmatprep.subr.mxu0 0.0
        %713 = vmatpush1.msra.mxu0 0.0
        %714 = vmatprep.mubr.f32.mxu0 0.0
        %715 = vmatmul.mubr.f32.gmra.mrb[0].mxu0 %v645
        %v716 = vpop.f32.mrb[0].mxu0
        %v717 = vadd.f32 %v643, %v716
        %v718 = vpop.f32.mrb[0].mxu0
        %719 = vmatprep.mubr.f32.mxu0 0.0
        %720 = vmatmul.mubr.f32.gmra.mrb[0].mxu0 %v648
        %v721 = vpop.f32.mrb[0].mxu0
        %v722 = vadd.f32 %v643, %v721
        %v723 = vpop.f32.mrb[0].mxu0
        %724 = vdwg.mxu0
        %727 = vrot.lane.b32.xlu0 %v626, 120
        %v728 = vpop.permute.xlu0 %727
        %729 = vrot.lane.b32.xlu0 %v631, 120
        %v730 = vpop.permute.xlu0 %729
        %731 = vrot.lane.b32.xlu0 %v626, 112
        %v732 = vpop.permute.xlu0 %731
        %733 = vrot.lane.b32.xlu0 %v631, 112
        %v734 = vpop.permute.xlu0 %733
        %735 = vrot.lane.b32.xlu0 %v626, 104
        %v736 = vpop.permute.xlu0 %735
        %737 = vrot.lane.b32.xlu0 %v631, 104
        %v738 = vpop.permute.xlu0 %737
        %741 = vrot.lane.b32.xlu0 %v717, 120
        %v742 = vpop.permute.xlu0 %741
        %743 = vrot.lane.b32.xlu0 %v722, 120
        %v744 = vpop.permute.xlu0 %743
        %747 = vrot.lane.b32.xlu0 %v717, 112
        %v748 = vpop.permute.xlu0 %747
        %749 = vrot.lane.b32.xlu0 %v722, 112
        %v750 = vpop.permute.xlu0 %749
        %753 = vrot.lane.b32.xlu0 %v717, 104
        %v754 = vpop.permute.xlu0 %753
        %755 = vrot.lane.b32.xlu0 %v722, 104
        %v756 = vpop.permute.xlu0 %755
        %v759 = vld [vmem:[#allocation2] sm:$0xff]
        %v760 = vld [vmem:[#allocation2 + $0x8] sm:$0xff]
        %v761 = vld [vmem:[#allocation2 + $0x10] sm:$0xff]
        %v762 = vld [vmem:[#allocation2 + $0x18] sm:$0xff]
        %vm763 = vcmask 64512
        %v765 = vsel %vm763, %v759, 0
        %v767 = vsel %vm763, %v626, 0
        %v769 = vsel %vm763, %v631, 0
        %771 = vmatprep.subr.mxu0 0.0
        %772 = vmatpush1.xpose.msra.mxu0 %v767
        %773 = vmatprep.subr.mxu0 0.0
        %774 = vmatpush1.xpose.msra.mxu0 %v769
        %775 = vmatprep.subr.mxu0 0.0
        %776 = vmatpush1.xpose.msra.mxu0 0.0
        %777 = vmatprep.subr.mxu0 0.0
        %778 = vmatpush1.xpose.msra.mxu0 0.0
        %779 = vmatprep.subr.mxu0 0.0
        %780 = vmatpush1.xpose.msra.mxu0 0.0
        %781 = vmatprep.subr.mxu0 0.0
        %782 = vmatpush1.xpose.msra.mxu0 0.0
        %783 = vmatprep.subr.mxu0 0.0
        %784 = vmatpush1.xpose.msra.mxu0 0.0
        %785 = vmatprep.subr.mxu0 0.0
        %786 = vmatpush1.xpose.msra.mxu0 0.0
        %787 = vmatprep.subr.mxu0 0.0
        %788 = vmatpush1.xpose.msra.mxu0 0.0
        %789 = vmatprep.subr.mxu0 0.0
        %790 = vmatpush1.xpose.msra.mxu0 0.0
        %791 = vmatprep.subr.mxu0 0.0
        %792 = vmatpush1.xpose.msra.mxu0 0.0
        %793 = vmatprep.subr.mxu0 0.0
        %794 = vmatpush1.xpose.msra.mxu0 0.0
        %795 = vmatprep.subr.mxu0 0.0
        %796 = vmatpush1.xpose.msra.mxu0 0.0
        %797 = vmatprep.subr.mxu0 0.0
        %798 = vmatpush1.xpose.msra.mxu0 0.0
        %799 = vmatprep.subr.mxu0 0.0
        %800 = vmatpush1.xpose.msra.mxu0 0.0
        %801 = vmatprep.subr.mxu0 0.0
        %802 = vmatpush1.xpose.msra.mxu0 0.0
        %803 = vmatprep.subr.mxu0 0.0
        %804 = vmatpush1.xpose.msra.mxu0 0.0
        %805 = vmatprep.subr.mxu0 0.0
        %806 = vmatpush1.xpose.msra.mxu0 0.0
        %807 = vmatprep.subr.mxu0 0.0
        %808 = vmatpush1.xpose.msra.mxu0 0.0
        %809 = vmatprep.subr.mxu0 0.0
        %810 = vmatpush1.xpose.msra.mxu0 0.0
        %811 = vmatprep.subr.mxu0 0.0
        %812 = vmatpush1.xpose.msra.mxu0 0.0
        %813 = vmatprep.subr.mxu0 0.0
        %814 = vmatpush1.xpose.msra.mxu0 0.0
        %815 = vmatprep.subr.mxu0 0.0
        %816 = vmatpush1.xpose.msra.mxu0 0.0
        %817 = vmatprep.subr.mxu0 0.0
        %818 = vmatpush1.xpose.msra.mxu0 0.0
        %819 = vmatprep.subr.mxu0 0.0
        %820 = vmatpush1.xpose.msra.mxu0 0.0
        %821 = vmatprep.subr.mxu0 0.0
        %822 = vmatpush1.xpose.msra.mxu0 0.0
        %823 = vmatprep.subr.mxu0 0.0
        %824 = vmatpush1.xpose.msra.mxu0 0.0
        %825 = vmatprep.subr.mxu0 0.0
        %826 = vmatpush1.xpose.msra.mxu0 0.0
        %827 = vmatprep.subr.mxu0 0.0
        %828 = vmatpush1.xpose.msra.mxu0 0.0
        %829 = vmatprep.subr.mxu0 0.0
        %830 = vmatpush1.xpose.msra.mxu0 0.0
        %831 = vmatprep.subr.mxu0 0.0
        %832 = vmatpush1.xpose.msra.mxu0 0.0
        %833 = vmatprep.subr.mxu0 0.0
        %834 = vmatpush1.xpose.msra.mxu0 0.0
        %835 = vmatprep.mubr.f32.mxu0 0.0
        %836 = vmatmul.mubr.f32.gmra.mrb[0].mxu0 %v765
        %v837 = vpop.f32.mrb[0].mxu0
        %v838 = vadd.f32 0.0, %v837
        %v839 = vpop.f32.mrb[0].mxu0
        %840 = vdwg.mxu0
        %v842 = vsel %vm763, %v760, 0
        %v844 = vsel %vm763, %v728, 0
        %v846 = vsel %vm763, %v730, 0
        %848 = vmatprep.subr.mxu0 0.0
        %849 = vmatpush1.xpose.msra.mxu0 %v844
        %850 = vmatprep.subr.mxu0 0.0
        %851 = vmatpush1.xpose.msra.mxu0 %v846
        %852 = vmatprep.subr.mxu0 0.0
        %853 = vmatpush1.xpose.msra.mxu0 0.0
        %854 = vmatprep.subr.mxu0 0.0
        %855 = vmatpush1.xpose.msra.mxu0 0.0
        %856 = vmatprep.subr.mxu0 0.0
        %857 = vmatpush1.xpose.msra.mxu0 0.0
        %858 = vmatprep.subr.mxu0 0.0
        %859 = vmatpush1.xpose.msra.mxu0 0.0
        %860 = vmatprep.subr.mxu0 0.0
        %861 = vmatpush1.xpose.msra.mxu0 0.0
        %862 = vmatprep.subr.mxu0 0.0
        %863 = vmatpush1.xpose.msra.mxu0 0.0
        %864 = vmatprep.subr.mxu0 0.0
        %865 = vmatpush1.xpose.msra.mxu0 0.0
        %866 = vmatprep.subr.mxu0 0.0
        %867 = vmatpush1.xpose.msra.mxu0 0.0
        %868 = vmatprep.subr.mxu0 0.0
        %869 = vmatpush1.xpose.msra.mxu0 0.0
        %870 = vmatprep.subr.mxu0 0.0
        %871 = vmatpush1.xpose.msra.mxu0 0.0
        %872 = vmatprep.subr.mxu0 0.0
        %873 = vmatpush1.xpose.msra.mxu0 0.0
        %874 = vmatprep.subr.mxu0 0.0
        %875 = vmatpush1.xpose.msra.mxu0 0.0
        %876 = vmatprep.subr.mxu0 0.0
        %877 = vmatpush1.xpose.msra.mxu0 0.0
        %878 = vmatprep.subr.mxu0 0.0
        %879 = vmatpush1.xpose.msra.mxu0 0.0
        %880 = vmatprep.subr.mxu0 0.0
        %881 = vmatpush1.xpose.msra.mxu0 0.0
        %882 = vmatprep.subr.mxu0 0.0
        %883 = vmatpush1.xpose.msra.mxu0 0.0
        %884 = vmatprep.subr.mxu0 0.0
        %885 = vmatpush1.xpose.msra.mxu0 0.0
        %886 = vmatprep.subr.mxu0 0.0
        %887 = vmatpush1.xpose.msra.mxu0 0.0
        %888 = vmatprep.subr.mxu0 0.0
        %889 = vmatpush1.xpose.msra.mxu0 0.0
        %890 = vmatprep.subr.mxu0 0.0
        %891 = vmatpush1.xpose.msra.mxu0 0.0
        %892 = vmatprep.subr.mxu0 0.0
        %893 = vmatpush1.xpose.msra.mxu0 0.0
        %894 = vmatprep.subr.mxu0 0.0
        %895 = vmatpush1.xpose.msra.mxu0 0.0
        %896 = vmatprep.subr.mxu0 0.0
        %897 = vmatpush1.xpose.msra.mxu0 0.0
        %898 = vmatprep.subr.mxu0 0.0
        %899 = vmatpush1.xpose.msra.mxu0 0.0
        %900 = vmatprep.subr.mxu0 0.0
        %901 = vmatpush1.xpose.msra.mxu0 0.0
        %902 = vmatprep.subr.mxu0 0.0
        %903 = vmatpush1.xpose.msra.mxu0 0.0
        %904 = vmatprep.subr.mxu0 0.0
        %905 = vmatpush1.xpose.msra.mxu0 0.0
        %906 = vmatprep.subr.mxu0 0.0
        %907 = vmatpush1.xpose.msra.mxu0 0.0
        %908 = vmatprep.subr.mxu0 0.0
        %909 = vmatpush1.xpose.msra.mxu0 0.0
        %910 = vmatprep.subr.mxu0 0.0
        %911 = vmatpush1.xpose.msra.mxu0 0.0
        %912 = vmatprep.mubr.f32.mxu0 0.0
        %913 = vmatmul.mubr.f32.gmra.mrb[0].mxu0 %v842
        %v914 = vpop.f32.mrb[0].mxu0
        %v915 = vadd.f32 0.0, %v914
        %v916 = vpop.f32.mrb[0].mxu0
        %917 = vdwg.mxu0
        %v919 = vsel %vm763, %v761, 0
        %v921 = vsel %vm763, %v732, 0
        %v923 = vsel %vm763, %v734, 0
        %925 = vmatprep.subr.mxu0 0.0
        %926 = vmatpush1.xpose.msra.mxu0 %v921
        %927 = vmatprep.subr.mxu0 0.0
        %928 = vmatpush1.xpose.msra.mxu0 %v923
        %929 = vmatprep.subr.mxu0 0.0
        %930 = vmatpush1.xpose.msra.mxu0 0.0
        %931 = vmatprep.subr.mxu0 0.0
        %932 = vmatpush1.xpose.msra.mxu0 0.0
        %933 = vmatprep.subr.mxu0 0.0
        %934 = vmatpush1.xpose.msra.mxu0 0.0
        %935 = vmatprep.subr.mxu0 0.0
        %936 = vmatpush1.xpose.msra.mxu0 0.0
        %937 = vmatprep.subr.mxu0 0.0
        %938 = vmatpush1.xpose.msra.mxu0 0.0
        %939 = vmatprep.subr.mxu0 0.0
        %940 = vmatpush1.xpose.msra.mxu0 0.0
        %941 = vmatprep.subr.mxu0 0.0
        %942 = vmatpush1.xpose.msra.mxu0 0.0
        %943 = vmatprep.subr.mxu0 0.0
        %944 = vmatpush1.xpose.msra.mxu0 0.0
        %945 = vmatprep.subr.mxu0 0.0
        %946 = vmatpush1.xpose.msra.mxu0 0.0
        %947 = vmatprep.subr.mxu0 0.0
        %948 = vmatpush1.xpose.msra.mxu0 0.0
        %949 = vmatprep.subr.mxu0 0.0
        %950 = vmatpush1.xpose.msra.mxu0 0.0
        %951 = vmatprep.subr.mxu0 0.0
        %952 = vmatpush1.xpose.msra.mxu0 0.0
        %953 = vmatprep.subr.mxu0 0.0
        %954 = vmatpush1.xpose.msra.mxu0 0.0
        %955 = vmatprep.subr.mxu0 0.0
        %956 = vmatpush1.xpose.msra.mxu0 0.0
        %957 = vmatprep.subr.mxu0 0.0
        %958 = vmatpush1.xpose.msra.mxu0 0.0
        %959 = vmatprep.subr.mxu0 0.0
        %960 = vmatpush1.xpose.msra.mxu0 0.0
        %961 = vmatprep.subr.mxu0 0.0
        %962 = vmatpush1.xpose.msra.mxu0 0.0
        %963 = vmatprep.subr.mxu0 0.0
        %964 = vmatpush1.xpose.msra.mxu0 0.0
        %965 = vmatprep.subr.mxu0 0.0
        %966 = vmatpush1.xpose.msra.mxu0 0.0
        %967 = vmatprep.subr.mxu0 0.0
        %968 = vmatpush1.xpose.msra.mxu0 0.0
        %969 = vmatprep.subr.mxu0 0.0
        %970 = vmatpush1.xpose.msra.mxu0 0.0
        %971 = vmatprep.subr.mxu0 0.0
        %972 = vmatpush1.xpose.msra.mxu0 0.0
        %973 = vmatprep.subr.mxu0 0.0
        %974 = vmatpush1.xpose.msra.mxu0 0.0
        %975 = vmatprep.subr.mxu0 0.0
        %976 = vmatpush1.xpose.msra.mxu0 0.0
        %977 = vmatprep.subr.mxu0 0.0
        %978 = vmatpush1.xpose.msra.mxu0 0.0
        %979 = vmatprep.subr.mxu0 0.0
        %980 = vmatpush1.xpose.msra.mxu0 0.0
        %981 = vmatprep.subr.mxu0 0.0
        %982 = vmatpush1.xpose.msra.mxu0 0.0
        %983 = vmatprep.subr.mxu0 0.0
        %984 = vmatpush1.xpose.msra.mxu0 0.0
        %985 = vmatprep.subr.mxu0 0.0
        %986 = vmatpush1.xpose.msra.mxu0 0.0
        %987 = vmatprep.subr.mxu0 0.0
        %988 = vmatpush1.xpose.msra.mxu0 0.0
        %989 = vmatprep.mubr.f32.mxu0 0.0
        %990 = vmatmul.mubr.f32.gmra.mrb[0].mxu0 %v919
        %v991 = vpop.f32.mrb[0].mxu0
        %v992 = vadd.f32 0.0, %v991
        %v993 = vpop.f32.mrb[0].mxu0
        %994 = vdwg.mxu0
        %v996 = vsel %vm763, %v762, 0
        %v998 = vsel %vm763, %v736, 0
        %v1000 = vsel %vm763, %v738, 0
        %1002 = vmatprep.subr.mxu0 0.0
        %1003 = vmatpush1.xpose.msra.mxu0 %v998
        %1004 = vmatprep.subr.mxu0 0.0
        %1005 = vmatpush1.xpose.msra.mxu0 %v1000
        %1006 = vmatprep.subr.mxu0 0.0
        %1007 = vmatpush1.xpose.msra.mxu0 0.0
        %1008 = vmatprep.subr.mxu0 0.0
        %1009 = vmatpush1.xpose.msra.mxu0 0.0
        %1010 = vmatprep.subr.mxu0 0.0
        %1011 = vmatpush1.xpose.msra.mxu0 0.0
        %1012 = vmatprep.subr.mxu0 0.0
        %1013 = vmatpush1.xpose.msra.mxu0 0.0
        %1014 = vmatprep.subr.mxu0 0.0
        %1015 = vmatpush1.xpose.msra.mxu0 0.0
        %1016 = vmatprep.subr.mxu0 0.0
        %1017 = vmatpush1.xpose.msra.mxu0 0.0
        %1018 = vmatprep.subr.mxu0 0.0
        %1019 = vmatpush1.xpose.msra.mxu0 0.0
        %1020 = vmatprep.subr.mxu0 0.0
        %1021 = vmatpush1.xpose.msra.mxu0 0.0
        %1022 = vmatprep.subr.mxu0 0.0
        %1023 = vmatpush1.xpose.msra.mxu0 0.0
        %1024 = vmatprep.subr.mxu0 0.0
        %1025 = vmatpush1.xpose.msra.mxu0 0.0
        %1026 = vmatprep.subr.mxu0 0.0
        %1027 = vmatpush1.xpose.msra.mxu0 0.0
        %1028 = vmatprep.subr.mxu0 0.0
        %1029 = vmatpush1.xpose.msra.mxu0 0.0
        %1030 = vmatprep.subr.mxu0 0.0
        %1031 = vmatpush1.xpose.msra.mxu0 0.0
        %1032 = vmatprep.subr.mxu0 0.0
        %1033 = vmatpush1.xpose.msra.mxu0 0.0
        %1034 = vmatprep.subr.mxu0 0.0
        %1035 = vmatpush1.xpose.msra.mxu0 0.0
        %1036 = vmatprep.subr.mxu0 0.0
        %1037 = vmatpush1.xpose.msra.mxu0 0.0
        %1038 = vmatprep.subr.mxu0 0.0
        %1039 = vmatpush1.xpose.msra.mxu0 0.0
        %1040 = vmatprep.subr.mxu0 0.0
        %1041 = vmatpush1.xpose.msra.mxu0 0.0
        %1042 = vmatprep.subr.mxu0 0.0
        %1043 = vmatpush1.xpose.msra.mxu0 0.0
        %1044 = vmatprep.subr.mxu0 0.0
        %1045 = vmatpush1.xpose.msra.mxu0 0.0
        %1046 = vmatprep.subr.mxu0 0.0
        %1047 = vmatpush1.xpose.msra.mxu0 0.0
        %1048 = vmatprep.subr.mxu0 0.0
        %1049 = vmatpush1.xpose.msra.mxu0 0.0
        %1050 = vmatprep.subr.mxu0 0.0
        %1051 = vmatpush1.xpose.msra.mxu0 0.0
        %1052 = vmatprep.subr.mxu0 0.0
        %1053 = vmatpush1.xpose.msra.mxu0 0.0
        %1054 = vmatprep.subr.mxu0 0.0
        %1055 = vmatpush1.xpose.msra.mxu0 0.0
        %1056 = vmatprep.subr.mxu0 0.0
        %1057 = vmatpush1.xpose.msra.mxu0 0.0
        %1058 = vmatprep.subr.mxu0 0.0
        %1059 = vmatpush1.xpose.msra.mxu0 0.0
        %1060 = vmatprep.subr.mxu0 0.0
        %1061 = vmatpush1.xpose.msra.mxu0 0.0
        %1062 = vmatprep.subr.mxu0 0.0
        %1063 = vmatpush1.xpose.msra.mxu0 0.0
        %1064 = vmatprep.subr.mxu0 0.0
        %1065 = vmatpush1.xpose.msra.mxu0 0.0
        %1066 = vmatprep.mubr.f32.mxu0 0.0
        %1067 = vmatmul.mubr.f32.gmra.mrb[0].mxu0 %v996
        %v1068 = vpop.f32.mrb[0].mxu0
        %v1069 = vadd.f32 0.0, %v1068
        %v1070 = vpop.f32.mrb[0].mxu0
        %1071 = vdwg.mxu0
        %v1072 = vld [vmem:[#allocation3] sm:$0xff]
        %v1073 = vld [vmem:[#allocation3 + $0x8] sm:$0xff]
        %v1074 = vld [vmem:[#allocation3 + $0x10] sm:$0xff]
        %v1075 = vld [vmem:[#allocation3 + $0x18] sm:$0xff]
        %vm1076 = vcmask 130048
        %v1077 = vsel %vm1076, %v838, -inf
        %1078 = vmax.xlane.f32.xlu0 %v1077
        %v1079 = vpop.xlane.xlu0 %1078
        %v1080 = vsel %vm1076, %v915, -inf
        %1081 = vmax.xlane.f32.xlu0 %v1080
        %v1082 = vpop.xlane.xlu0 %1081
        %v1083 = vsel %vm1076, %v992, -inf
        %1084 = vmax.xlane.f32.xlu0 %v1083
        %v1085 = vpop.xlane.xlu0 %1084
        %v1086 = vsel %vm1076, %v1069, -inf
        %1087 = vmax.xlane.f32.xlu0 %v1086
        %v1088 = vpop.xlane.xlu0 %1087
        %v1089 = vmax.f32 %v1072, %v1079
        %v1090 = vmax.f32 %v1073, %v1082
        %v1091 = vmax.f32 %v1074, %v1085
        %v1092 = vmax.f32 %v1075, %v1088
        %v1093 = vsub.f32 %v1072, %v1089
        %v1094 = vsub.f32 %v1073, %v1090
        %v1095 = vsub.f32 %v1074, %v1091
        %v1096 = vsub.f32 %v1075, %v1092
        %v1097 = vmul.f32 %v1093, 1.442695
        %v1098 = vpow.pop %v1097
        %v1099 = vmul.f32 %v1094, 1.442695
        %v1100 = vpow.pop %v1099
        %v1101 = vmul.f32 %v1095, 1.442695
        %v1102 = vpow.pop %v1101
        %v1103 = vmul.f32 %v1096, 1.442695
        %v1104 = vpow.pop %v1103
        %1106 = vset.pattern.permute.xlu0 0
        %1107 = vperm.xlu0 %1106, %v1089
        %v1108 = vpop.permute.xlu0 %1107
        %1111 = vset.pattern.permute.xlu0 0
        %1112 = vperm.xlu0 %1111, %v1090
        %v1113 = vpop.permute.xlu0 %1112
        %1116 = vset.pattern.permute.xlu0 0
        %1117 = vperm.xlu0 %1116, %v1091
        %v1118 = vpop.permute.xlu0 %1117
        %1121 = vset.pattern.permute.xlu0 0
        %1122 = vperm.xlu0 %1121, %v1092
        %v1123 = vpop.permute.xlu0 %1122
        %v1125 = vsub.f32 %v838, %v1108
        %v1126 = vsub.f32 %v915, %v1113
        %v1127 = vsub.f32 %v992, %v1118
        %v1128 = vsub.f32 %v1069, %v1123
        %v1129 = vmul.f32 %v1125, 1.442695
        %v1130 = vpow.pop %v1129
        %v1131 = vmul.f32 %v1126, 1.442695
        %v1132 = vpow.pop %v1131
        %v1133 = vmul.f32 %v1127, 1.442695
        %v1134 = vpow.pop %v1133
        %v1135 = vmul.f32 %v1128, 1.442695
        %v1136 = vpow.pop %v1135
        %v1137 = vld [vmem:[#allocation4] sm:$0xff]
        %v1138 = vld [vmem:[#allocation4 + $0x8] sm:$0xff]
        %v1139 = vld [vmem:[#allocation4 + $0x10] sm:$0xff]
        %v1140 = vld [vmem:[#allocation4 + $0x18] sm:$0xff]
        %v1141 = vmul.f32 %v1098, %v1137
        %v1142 = vmul.f32 %v1100, %v1138
        %v1143 = vmul.f32 %v1102, %v1139
        %v1144 = vmul.f32 %v1104, %v1140
        %v1145 = vsel %vm1076, %v1130, 0.0
        %1146 = vadd.xlane.f32.xlu0 %v1145
        %v1147 = vpop.xlane.xlu0 %1146
        %v1148 = vsel %vm1076, %v1132, 0.0
        %1149 = vadd.xlane.f32.xlu0 %v1148
        %v1150 = vpop.xlane.xlu0 %1149
        %v1151 = vsel %vm1076, %v1134, 0.0
        %1152 = vadd.xlane.f32.xlu0 %v1151
        %v1153 = vpop.xlane.xlu0 %1152
        %v1154 = vsel %vm1076, %v1136, 0.0
        %1155 = vadd.xlane.f32.xlu0 %v1154
        %v1156 = vpop.xlane.xlu0 %1155
        %v1157 = vadd.f32 %v1141, %v1147
        %v1158 = vadd.f32 %v1142, %v1150
        %v1159 = vadd.f32 %v1143, %v1153
        %v1160 = vadd.f32 %v1144, %v1156
        %vm1161 = vcmask 7168
        %1162 = vst.msk [vmem:[#allocation4] sm:$0xff] %vm1161, %v1157
        %1163 = vst.msk [vmem:[#allocation4 + $0x8] sm:$0xff] %vm1161, %v1158
        %1164 = vst.msk [vmem:[#allocation4 + $0x10] sm:$0xff] %vm1161, %v1159
        %1165 = vst.msk [vmem:[#allocation4 + $0x18] sm:$0xff] %vm1161, %v1160
        %v1166 = vld [vmem:[#allocation5] sm:$0xff]
        %v1167 = vld [vmem:[#allocation5 + $0x8] sm:$0xff]
        %v1168 = vld [vmem:[#allocation5 + $0x10] sm:$0xff]
        %v1169 = vld [vmem:[#allocation5 + $0x18] sm:$0xff]
        %1171 = vset.pattern.permute.xlu0 0
        %1172 = vperm.xlu0 %1171, %v1098
        %v1173 = vpop.permute.xlu0 %1172
        %1176 = vset.pattern.permute.xlu0 0
        %1177 = vperm.xlu0 %1176, %v1100
        %v1178 = vpop.permute.xlu0 %1177
        %1181 = vset.pattern.permute.xlu0 0
        %1182 = vperm.xlu0 %1181, %v1102
        %v1183 = vpop.permute.xlu0 %1182
        %1186 = vset.pattern.permute.xlu0 0
        %1187 = vperm.xlu0 %1186, %v1104
        %v1188 = vpop.permute.xlu0 %1187
        %v1190 = vmul.f32 %v1173, %v1166
        %v1191 = vmul.f32 %v1178, %v1167
        %v1192 = vmul.f32 %v1183, %v1168
        %v1193 = vmul.f32 %v1188, %v1169
        %v1195 = vsel %vm1076, %v1130, 0
        %1197 = vmatprep.subr.mxu0 0.0
        %1198 = vmatpush1.msra.mxu0 %v717
        %1199 = vmatprep.subr.mxu0 0.0
        %1200 = vmatpush1.msra.mxu0 %v722
        %1201 = vmatprep.subr.mxu0 0.0
        %1202 = vmatpush1.msra.mxu0 0.0
        %1203 = vmatprep.subr.mxu0 0.0
        %1204 = vmatpush1.msra.mxu0 0.0
        %1205 = vmatprep.subr.mxu0 0.0
        %1206 = vmatpush1.msra.mxu0 0.0
        %1207 = vmatprep.subr.mxu0 0.0
        %1208 = vmatpush1.msra.mxu0 0.0
        %1209 = vmatprep.subr.mxu0 0.0
        %1210 = vmatpush1.msra.mxu0 0.0
        %1211 = vmatprep.subr.mxu0 0.0
        %1212 = vmatpush1.msra.mxu0 0.0
        %1213 = vmatprep.subr.mxu0 0.0
        %1214 = vmatpush1.msra.mxu0 0.0
        %1215 = vmatprep.subr.mxu0 0.0
        %1216 = vmatpush1.msra.mxu0 0.0
        %1217 = vmatprep.subr.mxu0 0.0
        %1218 = vmatpush1.msra.mxu0 0.0
        %1219 = vmatprep.subr.mxu0 0.0
        %1220 = vmatpush1.msra.mxu0 0.0
        %1221 = vmatprep.subr.mxu0 0.0
        %1222 = vmatpush1.msra.mxu0 0.0
        %1223 = vmatprep.subr.mxu0 0.0
        %1224 = vmatpush1.msra.mxu0 0.0
        %1225 = vmatprep.subr.mxu0 0.0
        %1226 = vmatpush1.msra.mxu0 0.0
        %1227 = vmatprep.subr.mxu0 0.0
        %1228 = vmatpush1.msra.mxu0 0.0
        %1229 = vmatprep.subr.mxu0 0.0
        %1230 = vmatpush1.msra.mxu0 0.0
        %1231 = vmatprep.subr.mxu0 0.0
        %1232 = vmatpush1.msra.mxu0 0.0
        %1233 = vmatprep.subr.mxu0 0.0
        %1234 = vmatpush1.msra.mxu0 0.0
        %1235 = vmatprep.subr.mxu0 0.0
        %1236 = vmatpush1.msra.mxu0 0.0
        %1237 = vmatprep.subr.mxu0 0.0
        %1238 = vmatpush1.msra.mxu0 0.0
        %1239 = vmatprep.subr.mxu0 0.0
        %1240 = vmatpush1.msra.mxu0 0.0
        %1241 = vmatprep.subr.mxu0 0.0
        %1242 = vmatpush1.msra.mxu0 0.0
        %1243 = vmatprep.subr.mxu0 0.0
        %1244 = vmatpush1.msra.mxu0 0.0
        %1245 = vmatprep.subr.mxu0 0.0
        %1246 = vmatpush1.msra.mxu0 0.0
        %1247 = vmatprep.subr.mxu0 0.0
        %1248 = vmatpush1.msra.mxu0 0.0
        %1249 = vmatprep.subr.mxu0 0.0
        %1250 = vmatpush1.msra.mxu0 0.0
        %1251 = vmatprep.subr.mxu0 0.0
        %1252 = vmatpush1.msra.mxu0 0.0
        %1253 = vmatprep.subr.mxu0 0.0
        %1254 = vmatpush1.msra.mxu0 0.0
        %1255 = vmatprep.subr.mxu0 0.0
        %1256 = vmatpush1.msra.mxu0 0.0
        %1257 = vmatprep.subr.mxu0 0.0
        %1258 = vmatpush1.msra.mxu0 0.0
        %1259 = vmatprep.subr.mxu0 0.0
        %1260 = vmatpush1.msra.mxu0 0.0
        %1261 = vmatprep.mubr.f32.mxu0 0.0
        %1262 = vmatmul.mubr.f32.gmra.mrb[0].mxu0 %v1195
        %v1263 = vpop.f32.mrb[0].mxu0
        %v1264 = vadd.f32 0.0, %v1263
        %v1265 = vpop.f32.mrb[0].mxu0
        %1266 = vdwg.mxu0
        %v1268 = vsel %vm1076, %v1132, 0
        %1270 = vmatprep.subr.mxu0 0.0
        %1271 = vmatpush1.msra.mxu0 %v742
        %1272 = vmatprep.subr.mxu0 0.0
        %1273 = vmatpush1.msra.mxu0 %v744
        %1274 = vmatprep.subr.mxu0 0.0
        %1275 = vmatpush1.msra.mxu0 0.0
        %1276 = vmatprep.subr.mxu0 0.0
        %1277 = vmatpush1.msra.mxu0 0.0
        %1278 = vmatprep.subr.mxu0 0.0
        %1279 = vmatpush1.msra.mxu0 0.0
        %1280 = vmatprep.subr.mxu0 0.0
        %1281 = vmatpush1.msra.mxu0 0.0
        %1282 = vmatprep.subr.mxu0 0.0
        %1283 = vmatpush1.msra.mxu0 0.0
        %1284 = vmatprep.subr.mxu0 0.0
        %1285 = vmatpush1.msra.mxu0 0.0
        %1286 = vmatprep.subr.mxu0 0.0
        %1287 = vmatpush1.msra.mxu0 0.0
        %1288 = vmatprep.subr.mxu0 0.0
        %1289 = vmatpush1.msra.mxu0 0.0
        %1290 = vmatprep.subr.mxu0 0.0
        %1291 = vmatpush1.msra.mxu0 0.0
        %1292 = vmatprep.subr.mxu0 0.0
        %1293 = vmatpush1.msra.mxu0 0.0
        %1294 = vmatprep.subr.mxu0 0.0
        %1295 = vmatpush1.msra.mxu0 0.0
        %1296 = vmatprep.subr.mxu0 0.0
        %1297 = vmatpush1.msra.mxu0 0.0
        %1298 = vmatprep.subr.mxu0 0.0
        %1299 = vmatpush1.msra.mxu0 0.0
        %1300 = vmatprep.subr.mxu0 0.0
        %1301 = vmatpush1.msra.mxu0 0.0
        %1302 = vmatprep.subr.mxu0 0.0
        %1303 = vmatpush1.msra.mxu0 0.0
        %1304 = vmatprep.subr.mxu0 0.0
        %1305 = vmatpush1.msra.mxu0 0.0
        %1306 = vmatprep.subr.mxu0 0.0
        %1307 = vmatpush1.msra.mxu0 0.0
        %1308 = vmatprep.subr.mxu0 0.0
        %1309 = vmatpush1.msra.mxu0 0.0
        %1310 = vmatprep.subr.mxu0 0.0
        %1311 = vmatpush1.msra.mxu0 0.0
        %1312 = vmatprep.subr.mxu0 0.0
        %1313 = vmatpush1.msra.mxu0 0.0
        %1314 = vmatprep.subr.mxu0 0.0
        %1315 = vmatpush1.msra.mxu0 0.0
        %1316 = vmatprep.subr.mxu0 0.0
        %1317 = vmatpush1.msra.mxu0 0.0
        %1318 = vmatprep.subr.mxu0 0.0
        %1319 = vmatpush1.msra.mxu0 0.0
        %1320 = vmatprep.subr.mxu0 0.0
        %1321 = vmatpush1.msra.mxu0 0.0
        %1322 = vmatprep.subr.mxu0 0.0
        %1323 = vmatpush1.msra.mxu0 0.0
        %1324 = vmatprep.subr.mxu0 0.0
        %1325 = vmatpush1.msra.mxu0 0.0
        %1326 = vmatprep.subr.mxu0 0.0
        %1327 = vmatpush1.msra.mxu0 0.0
        %1328 = vmatprep.subr.mxu0 0.0
        %1329 = vmatpush1.msra.mxu0 0.0
        %1330 = vmatprep.subr.mxu0 0.0
        %1331 = vmatpush1.msra.mxu0 0.0
        %1332 = vmatprep.subr.mxu0 0.0
        %1333 = vmatpush1.msra.mxu0 0.0
        %1334 = vmatprep.mubr.f32.mxu0 0.0
        %1335 = vmatmul.mubr.f32.gmra.mrb[0].mxu0 %v1268
        %v1336 = vpop.f32.mrb[0].mxu0
        %v1337 = vadd.f32 0.0, %v1336
        %v1338 = vpop.f32.mrb[0].mxu0
        %1339 = vdwg.mxu0
        %v1341 = vsel %vm1076, %v1134, 0
        %1343 = vmatprep.subr.mxu0 0.0
        %1344 = vmatpush1.msra.mxu0 %v748
        %1345 = vmatprep.subr.mxu0 0.0
        %1346 = vmatpush1.msra.mxu0 %v750
        %1347 = vmatprep.subr.mxu0 0.0
        %1348 = vmatpush1.msra.mxu0 0.0
        %1349 = vmatprep.subr.mxu0 0.0
        %1350 = vmatpush1.msra.mxu0 0.0
        %1351 = vmatprep.subr.mxu0 0.0
        %1352 = vmatpush1.msra.mxu0 0.0
        %1353 = vmatprep.subr.mxu0 0.0
        %1354 = vmatpush1.msra.mxu0 0.0
        %1355 = vmatprep.subr.mxu0 0.0
        %1356 = vmatpush1.msra.mxu0 0.0
        %1357 = vmatprep.subr.mxu0 0.0
        %1358 = vmatpush1.msra.mxu0 0.0
        %1359 = vmatprep.subr.mxu0 0.0
        %1360 = vmatpush1.msra.mxu0 0.0
        %1361 = vmatprep.subr.mxu0 0.0
        %1362 = vmatpush1.msra.mxu0 0.0
        %1363 = vmatprep.subr.mxu0 0.0
        %1364 = vmatpush1.msra.mxu0 0.0
        %1365 = vmatprep.subr.mxu0 0.0
        %1366 = vmatpush1.msra.mxu0 0.0
        %1367 = vmatprep.subr.mxu0 0.0
        %1368 = vmatpush1.msra.mxu0 0.0
        %1369 = vmatprep.subr.mxu0 0.0
        %1370 = vmatpush1.msra.mxu0 0.0
        %1371 = vmatprep.subr.mxu0 0.0
        %1372 = vmatpush1.msra.mxu0 0.0
        %1373 = vmatprep.subr.mxu0 0.0
        %1374 = vmatpush1.msra.mxu0 0.0
        %1375 = vmatprep.subr.mxu0 0.0
        %1376 = vmatpush1.msra.mxu0 0.0
        %1377 = vmatprep.subr.mxu0 0.0
        %1378 = vmatpush1.msra.mxu0 0.0
        %1379 = vmatprep.subr.mxu0 0.0
        %1380 = vmatpush1.msra.mxu0 0.0
        %1381 = vmatprep.subr.mxu0 0.0
        %1382 = vmatpush1.msra.mxu0 0.0
        %1383 = vmatprep.subr.mxu0 0.0
        %1384 = vmatpush1.msra.mxu0 0.0
        %1385 = vmatprep.subr.mxu0 0.0
        %1386 = vmatpush1.msra.mxu0 0.0
        %1387 = vmatprep.subr.mxu0 0.0
        %1388 = vmatpush1.msra.mxu0 0.0
        %1389 = vmatprep.subr.mxu0 0.0
        %1390 = vmatpush1.msra.mxu0 0.0
        %1391 = vmatprep.subr.mxu0 0.0
        %1392 = vmatpush1.msra.mxu0 0.0
        %1393 = vmatprep.subr.mxu0 0.0
        %1394 = vmatpush1.msra.mxu0 0.0
        %1395 = vmatprep.subr.mxu0 0.0
        %1396 = vmatpush1.msra.mxu0 0.0
        %1397 = vmatprep.subr.mxu0 0.0
        %1398 = vmatpush1.msra.mxu0 0.0
        %1399 = vmatprep.subr.mxu0 0.0
        %1400 = vmatpush1.msra.mxu0 0.0
        %1401 = vmatprep.subr.mxu0 0.0
        %1402 = vmatpush1.msra.mxu0 0.0
        %1403 = vmatprep.subr.mxu0 0.0
        %1404 = vmatpush1.msra.mxu0 0.0
        %1405 = vmatprep.subr.mxu0 0.0
        %1406 = vmatpush1.msra.mxu0 0.0
        %1407 = vmatprep.mubr.f32.mxu0 0.0
        %1408 = vmatmul.mubr.f32.gmra.mrb[0].mxu0 %v1341
        %v1409 = vpop.f32.mrb[0].mxu0
        %v1410 = vadd.f32 0.0, %v1409
        %v1411 = vpop.f32.mrb[0].mxu0
        %1412 = vdwg.mxu0
        %v1414 = vsel %vm1076, %v1136, 0
        %1416 = vmatprep.subr.mxu0 0.0
        %1417 = vmatpush1.msra.mxu0 %v754
        %1418 = vmatprep.subr.mxu0 0.0
        %1419 = vmatpush1.msra.mxu0 %v756
        %1420 = vmatprep.subr.mxu0 0.0
        %1421 = vmatpush1.msra.mxu0 0.0
        %1422 = vmatprep.subr.mxu0 0.0
        %1423 = vmatpush1.msra.mxu0 0.0
        %1424 = vmatprep.subr.mxu0 0.0
        %1425 = vmatpush1.msra.mxu0 0.0
        %1426 = vmatprep.subr.mxu0 0.0
        %1427 = vmatpush1.msra.mxu0 0.0
        %1428 = vmatprep.subr.mxu0 0.0
        %1429 = vmatpush1.msra.mxu0 0.0
        %1430 = vmatprep.subr.mxu0 0.0
        %1431 = vmatpush1.msra.mxu0 0.0
        %1432 = vmatprep.subr.mxu0 0.0
        %1433 = vmatpush1.msra.mxu0 0.0
        %1434 = vmatprep.subr.mxu0 0.0
        %1435 = vmatpush1.msra.mxu0 0.0
        %1436 = vmatprep.subr.mxu0 0.0
        %1437 = vmatpush1.msra.mxu0 0.0
        %1438 = vmatprep.subr.mxu0 0.0
        %1439 = vmatpush1.msra.mxu0 0.0
        %1440 = vmatprep.subr.mxu0 0.0
        %1441 = vmatpush1.msra.mxu0 0.0
        %1442 = vmatprep.subr.mxu0 0.0
        %1443 = vmatpush1.msra.mxu0 0.0
        %1444 = vmatprep.subr.mxu0 0.0
        %1445 = vmatpush1.msra.mxu0 0.0
        %1446 = vmatprep.subr.mxu0 0.0
        %1447 = vmatpush1.msra.mxu0 0.0
        %1448 = vmatprep.subr.mxu0 0.0
        %1449 = vmatpush1.msra.mxu0 0.0
        %1450 = vmatprep.subr.mxu0 0.0
        %1451 = vmatpush1.msra.mxu0 0.0
        %1452 = vmatprep.subr.mxu0 0.0
        %1453 = vmatpush1.msra.mxu0 0.0
        %1454 = vmatprep.subr.mxu0 0.0
        %1455 = vmatpush1.msra.mxu0 0.0
        %1456 = vmatprep.subr.mxu0 0.0
        %1457 = vmatpush1.msra.mxu0 0.0
        %1458 = vmatprep.subr.mxu0 0.0
        %1459 = vmatpush1.msra.mxu0 0.0
        %1460 = vmatprep.subr.mxu0 0.0
        %1461 = vmatpush1.msra.mxu0 0.0
        %1462 = vmatprep.subr.mxu0 0.0
        %1463 = vmatpush1.msra.mxu0 0.0
        %1464 = vmatprep.subr.mxu0 0.0
        %1465 = vmatpush1.msra.mxu0 0.0
        %1466 = vmatprep.subr.mxu0 0.0
        %1467 = vmatpush1.msra.mxu0 0.0
        %1468 = vmatprep.subr.mxu0 0.0
        %1469 = vmatpush1.msra.mxu0 0.0
        %1470 = vmatprep.subr.mxu0 0.0
        %1471 = vmatpush1.msra.mxu0 0.0
        %1472 = vmatprep.subr.mxu0 0.0
        %1473 = vmatpush1.msra.mxu0 0.0
        %1474 = vmatprep.subr.mxu0 0.0
        %1475 = vmatpush1.msra.mxu0 0.0
        %1476 = vmatprep.subr.mxu0 0.0
        %1477 = vmatpush1.msra.mxu0 0.0
        %1478 = vmatprep.subr.mxu0 0.0
        %1479 = vmatpush1.msra.mxu0 0.0
        %1480 = vmatprep.mubr.f32.mxu0 0.0
        %1481 = vmatmul.mubr.f32.gmra.mrb[0].mxu0 %v1414
        %v1482 = vpop.f32.mrb[0].mxu0
        %v1483 = vadd.f32 0.0, %v1482
        %v1484 = vpop.f32.mrb[0].mxu0
        %1485 = vdwg.mxu0
        %v1486 = vadd.f32 %v1190, %v1264
        %v1487 = vadd.f32 %v1191, %v1337
        %v1488 = vadd.f32 %v1192, %v1410
        %v1489 = vadd.f32 %v1193, %v1483
        %1490 = vst.msk [vmem:[#allocation5] sm:$0xff] %vm763, %v1486
        %1491 = vst.msk [vmem:[#allocation5 + $0x8] sm:$0xff] %vm763, %v1487
        %1492 = vst.msk [vmem:[#allocation5 + $0x10] sm:$0xff] %vm763, %v1488
        %1493 = vst.msk [vmem:[#allocation5 + $0x18] sm:$0xff] %vm763, %v1489
        %1494 = vst.msk [vmem:[#allocation3] sm:$0xff] %vm1161, %v1089
        %1495 = vst.msk [vmem:[#allocation3 + $0x8] sm:$0xff] %vm1161, %v1090
        %1496 = vst.msk [vmem:[#allocation3 + $0x10] sm:$0xff] %vm1161, %v1091
        %1497 = vst.msk [vmem:[#allocation3 + $0x18] sm:$0xff] %vm1161, %v1092
        // Predicated region
        $region73: #{tpu_custom_call.1} parent=47 // pred_check
          %p1498 = pneg %p422
        $region74: #{tpu_custom_call.1} parent=47 // pred_check_branch
          %1500 = sbr.rel (%p1498) target = $region76
        $region75: #{tpu_custom_call.1} parent=47 // pred_region
          %v1501 = vld [vmem:[#allocation5] sm:$0xff]
          %v1502 = vld [vmem:[#allocation5 + $0x8] sm:$0xff]
          %v1503 = vld [vmem:[#allocation5 + $0x10] sm:$0xff]
          %v1504 = vld [vmem:[#allocation5 + $0x18] sm:$0xff]
          %v1505 = vld [vmem:[#allocation4] sm:$0xff]
          %v1506 = vld [vmem:[#allocation4 + $0x8] sm:$0xff]
          %v1507 = vld [vmem:[#allocation4 + $0x10] sm:$0xff]
          %v1508 = vld [vmem:[#allocation4 + $0x18] sm:$0xff]
          %v1509 = vrcp.pop %v1505
          %v1510 = vrcp.pop %v1506
          %v1511 = vrcp.pop %v1507
          %v1512 = vrcp.pop %v1508
          %1514 = vset.pattern.permute.xlu0 0
          %1515 = vperm.xlu0 %1514, %v1509
          %v1516 = vpop.permute.xlu0 %1515
          %1519 = vset.pattern.permute.xlu0 0
          %1520 = vperm.xlu0 %1519, %v1510
          %v1521 = vpop.permute.xlu0 %1520
          %1524 = vset.pattern.permute.xlu0 0
          %1525 = vperm.xlu0 %1524, %v1511
          %v1526 = vpop.permute.xlu0 %1525
          %1529 = vset.pattern.permute.xlu0 0
          %1530 = vperm.xlu0 %1529, %v1512
          %v1531 = vpop.permute.xlu0 %1530
          %v1533 = vmul.f32 %v1501, %v1516
          %v1534 = vmul.f32 %v1502, %v1521
          %v1535 = vmul.f32 %v1503, %v1526
          %v1536 = vmul.f32 %v1504, %v1531
          %1538 = vrot.lane.b32.xlu0 %v1534, 8
          %v1539 = vpop.permute.xlu0 %1538
          %1542 = vrot.lane.b32.xlu0 %v1535, 16
          %v1543 = vpop.permute.xlu0 %1542
          %1546 = vrot.lane.b32.xlu0 %v1536, 24
          %v1547 = vpop.permute.xlu0 %1546
          %v1549 = vsel %vm763, %v1533, %v1539
          %v1550 = vsel %vm1076, %v1549, %v1543
          %vm1551 = vcmask 195584
          %v1552 = vsel %vm1551, %v1550, %v1547
          %v1553 = vld [vmem:[#allocation14] sm:$0xff]
          %v1554 = vld [vmem:[#allocation14 + $0x8] sm:$0xff]
          %v1555 = vld [vmem:[#allocation14 + $0x10] sm:$0xff]
          %v1556 = vld [vmem:[#allocation14 + $0x18] sm:$0xff]
          %v1557 = vld [vmem:[%s6] sm:$0x1]
          %v1558 = vlaneseq
          %v1559 = vshrl.u32 %v1558, 7
          %v1560 = vsub.s32 0, %v1559
          %v1561 = vrot.slane %v1557, %v1560
          %v1563 = vsel %vm552, %v1552, 0
          %1565 = vmatprep.subr.mxu0 0.0
          %1566 = vmatpush1.msra.mxu0 %v1553
          %1567 = vmatprep.subr.mxu0 0.0
          %1568 = vmatpush1.msra.mxu0 %v1554
          %1569 = vmatprep.subr.mxu0 0.0
          %1570 = vmatpush1.msra.mxu0 %v1555
          %1571 = vmatprep.subr.mxu0 0.0
          %1572 = vmatpush1.msra.mxu0 %v1556
          %1573 = vmatprep.subr.mxu0 0.0
          %1574 = vmatpush1.msra.mxu0 0.0
          %1575 = vmatprep.subr.mxu0 0.0
          %1576 = vmatpush1.msra.mxu0 0.0
          %1577 = vmatprep.subr.mxu0 0.0
          %1578 = vmatpush1.msra.mxu0 0.0
          %1579 = vmatprep.subr.mxu0 0.0
          %1580 = vmatpush1.msra.mxu0 0.0
          %1581 = vmatprep.subr.mxu0 0.0
          %1582 = vmatpush1.msra.mxu0 0.0
          %1583 = vmatprep.subr.mxu0 0.0
          %1584 = vmatpush1.msra.mxu0 0.0
          %1585 = vmatprep.subr.mxu0 0.0
          %1586 = vmatpush1.msra.mxu0 0.0
          %1587 = vmatprep.subr.mxu0 0.0
          %1588 = vmatpush1.msra.mxu0 0.0
          %1589 = vmatprep.subr.mxu0 0.0
          %1590 = vmatpush1.msra.mxu0 0.0
          %1591 = vmatprep.subr.mxu0 0.0
          %1592 = vmatpush1.msra.mxu0 0.0
          %1593 = vmatprep.subr.mxu0 0.0
          %1594 = vmatpush1.msra.mxu0 0.0
          %1595 = vmatprep.subr.mxu0 0.0
          %1596 = vmatpush1.msra.mxu0 0.0
          %1597 = vmatprep.subr.mxu0 0.0
          %1598 = vmatpush1.msra.mxu0 0.0
          %1599 = vmatprep.subr.mxu0 0.0
          %1600 = vmatpush1.msra.mxu0 0.0
          %1601 = vmatprep.subr.mxu0 0.0
          %1602 = vmatpush1.msra.mxu0 0.0
          %1603 = vmatprep.subr.mxu0 0.0
          %1604 = vmatpush1.msra.mxu0 0.0
          %1605 = vmatprep.subr.mxu0 0.0
          %1606 = vmatpush1.msra.mxu0 0.0
          %1607 = vmatprep.subr.mxu0 0.0
          %1608 = vmatpush1.msra.mxu0 0.0
          %1609 = vmatprep.subr.mxu0 0.0
          %1610 = vmatpush1.msra.mxu0 0.0
          %1611 = vmatprep.subr.mxu0 0.0
          %1612 = vmatpush1.msra.mxu0 0.0
          %1613 = vmatprep.subr.mxu0 0.0
          %1614 = vmatpush1.msra.mxu0 0.0
          %1615 = vmatprep.subr.mxu0 0.0
          %1616 = vmatpush1.msra.mxu0 0.0
          %1617 = vmatprep.subr.mxu0 0.0
          %1618 = vmatpush1.msra.mxu0 0.0
          %1619 = vmatprep.subr.mxu0 0.0
          %1620 = vmatpush1.msra.mxu0 0.0
          %1621 = vmatprep.subr.mxu0 0.0
          %1622 = vmatpush1.msra.mxu0 0.0
          %1623 = vmatprep.subr.mxu0 0.0
          %1624 = vmatpush1.msra.mxu0 0.0
          %1625 = vmatprep.subr.mxu0 0.0
          %1626 = vmatpush1.msra.mxu0 0.0
          %1627 = vmatprep.subr.mxu0 0.0
          %1628 = vmatpush1.msra.mxu0 0.0
          %1629 = vmatprep.mubr.f32.mxu0 0.0
          %1630 = vmatmul.mubr.f32.gmra.mrb[0].mxu0 %v1563
          %v1631 = vpop.f32.mrb[0].mxu0
          %v1632 = vadd.f32 %v1561, %v1631
          %v1633 = vpop.f32.mrb[0].mxu0
          %1634 = vdwg.mxu0
          %v1635 = vld [vmem:[%s353] sm:$0xff]
          %v1636 = vadd.f32 %v1635, %v1632
          %v1637 = vsel %vm552, %v1636, 0.0
          %1638 = vadd.xlane.f32.xlu0 %v1637
          %v1639 = vpop.xlane.xlu0 %1638
          %v1640 = vrcp.pop 32.0
          %v1641 = vmul.f32 %v1639, %v1640
          %v1642 = vsub.f32 %v1636, %v1641
          %v1643 = vmul.f32 %v1642, %v1642
          %v1644 = vsel %vm552, %v1643, 0.0
          %1645 = vadd.xlane.f32.xlu0 %v1644
          %v1646 = vpop.xlane.xlu0 %1645
          %v1647 = vmul.f32 %v1646, %v1640
          %v1648 = vadd.f32 %v1647, 1e-05
          %v1649 = vrsqrt.pop %v1648
          %v1650 = vmul.f32 %v1642, %v1649
          %v1651 = vld [vmem:[%s6 + $0x1] sm:$0x1]
          %v1652 = vlaneseq
          %v1653 = vshrl.u32 %v1652, 7
          %v1654 = vsub.s32 0, %v1653
          %v1655 = vrot.slane %v1651, %v1654
          %v1656 = vmul.f32 %v1650, %v1655
          %v1657 = vld [vmem:[%s6 + $0x2] sm:$0x1]
          %v1658 = vlaneseq
          %v1659 = vshrl.u32 %v1658, 7
          %v1660 = vsub.s32 0, %v1659
          %v1661 = vrot.slane %v1657, %v1660
          %v1662 = vadd.f32 %v1656, %v1661
          %1663 = vst.msk [vmem:[%s419] sm:$0xff] %vm552, %v1662
        $region76: #{tpu_custom_call.1} parent=47 // pred_fallthru
          _
        %s1664 = sand.u32 %s214, 1
        %s1665 = scalar_lea.sflag [#allocation8], %s1664
        %s1666 = sand.u32 %s214, 1
        %s1667 = smul.addr %s1666, 8
        %s1668 = scalar_lea.vmem [#allocation15], %s1667
        // Predicated region
        $region77: #{tpu_custom_call.1} parent=47 // pred_check
          %p1669 = pneg %p224
        $region78: #{tpu_custom_call.1} parent=47 // pred_check_branch
          %1671 = sbr.rel (%p1669) target = $region80
        $region79: #{tpu_custom_call.1} parent=47 // pred_region
          %s1673 = ssub.s32 128, 128
          %1674 = vsyncadd %s1665, %s1673
          %s1675 = smul.addr %s32, 128
          %s1676 = scalar_lea.hbm %s7, %s1675
          %s1678 = sshll.u32 %s1668, 4
          %s1679 = int_to_ptr.vmem [resolvable:$true] %s1678
          %1681 = dma.vmem_to_hbm [thread:$0]  %s1679, 128, %s1676, %s1665
        $region80: #{tpu_custom_call.1} parent=47 // pred_fallthru
          _
      $region48: #{tpu_custom_call.1} parent=5 // pred_fallthru
        _
      %p1682 = scmp.le.s32.totalorder 2, %s23
      // Predicated region
      $region81: #{tpu_custom_call.1} parent=5 // pred_check
        %p1683 = pneg %p1682
      $region82: #{tpu_custom_call.1} parent=5 // pred_check_branch
        %1685 = sbr.rel (%p1683) target = $region84
      $region83: #{tpu_custom_call.1} parent=5 // pred_region
        %s1686 = ssub.s32 %s23, 2
        // Predicated region
        $region85: #{tpu_custom_call.1} parent=83 // pred_check
          %p1687 = pneg %p230
        $region86: #{tpu_custom_call.1} parent=83 // pred_check_branch
          %1689 = sbr.rel (%p1687) target = $region88
        $region87: #{tpu_custom_call.1} parent=83 // pred_region
          %s1690 = sand.u32 %s215, 1
          %s1691 = scalar_lea.sflag [#allocation8], %s1690
          %s1692 = sand.u32 %s215, 1
          %s1693 = smul.addr %s1692, 8
          %s1694 = scalar_lea.vmem [#allocation15], %s1693
          %1695 = dma.done %s1691, 128
        $region88: #{tpu_custom_call.1} parent=83 // pred_fallthru
          _
      $region84: #{tpu_custom_call.1} parent=5 // pred_fallthru
        _
    $region6: #{tpu_custom_call.1} parent=1 // loop_footer
      %s27 = sadd.s32 1, %s23
    $region7: #{tpu_custom_call.1} parent=1 // loop_footer_branch
      %22 = sbr.rel target = $region3
    $region8: #{tpu_custom_call.1} parent=1 // loop_exit
      _
    %1696 = vsyncpa [#allocation7], 1
    %s1697 = scalar_lea.sflag [#allocation7], 1
    %1698 = vsyncpa %s1697, 1
    %1699 = vsyncpa [#allocation10], 1
    %s1700 = scalar_lea.sflag [#allocation10], 1
    %1701 = vsyncpa %s1700, 1
    %1702 = vsyncpa [#allocation13], 1
    %1703 = vsyncpa [#allocation8], 1
    %s1704 = scalar_lea.sflag [#allocation8], 1
    %1705 = vsyncpa %s1704, 1

</llo_original>
